<compile_context>
chip_gen: v6e
topology: v6e:2x2x1
jax: 0.10.0
libtpu: 0.0.40
codegen_flags: <defaults>
</compile_context>

<pallas_src>
import math
import functools

import jax
import jax.numpy as jnp
from jax.experimental import pallas as pl
from jax.experimental.pallas import tpu as pltpu


def _rezero_kernel(src_ref, wc_ref, wqkv_ref, wo_ref, w1_ref, b1_ref,
                   w2_ref, wd_ref, bias_ref, rw_ref, out_ref,
                   *, batch, seq, d_model):
    f32 = jnp.float32
    D = d_model
    N = batch * seq

    rw = rw_ref[0, 0]  # ReZero residual weight (scalar, SMEM)

    # bf16 weights (half the HBM/DMA bytes); upcast on-chip, accumulate in f32.
    wc = wc_ref[...].astype(f32)       # (F, D)   sqrt(ninp) folded in
    wqkv = wqkv_ref[...].astype(f32)   # (D, 384) sections at lanes 0/128/256
    wo = wo_ref[...].astype(f32)       # (128, D) rows D..127 zero-padded
    w1 = w1_ref[...].astype(f32)       # (D, nhid)
    w2 = w2_ref[...].astype(f32)       # (nhid, D) standard layout -> plain dot
    wd = wd_ref[...].astype(f32)       # (D, 128) cols final_cats..127 zero

    # linear_compress + sqrt(ninp) scaling (scale folded into wc / bias row 0)
    h = jnp.dot(src_ref[...], wc, preferred_element_type=f32)
    h = h + bias_ref[0:1, 0:D]

    # ---- fused single-head self attention (nhead = 1) ----
    qkv = jnp.dot(h, wqkv, preferred_element_type=f32)          # (N, 384)
    # Full 128-lane, tile-aligned sections; lanes D..127 are exactly zero.
    q = qkv[:, 0:128] + bias_ref[1:2, :]       # 1/sqrt(D) folded in
    k = qkv[:, 128:256] + bias_ref[2:3, :]
    v = qkv[:, 256:384] + bias_ref[3:4, :]

    # Block-diagonal causal attention over all batch*seq tokens at once
    # (fine at N = 16; grid per-batch if N ever grows into the hundreds).
    sc = jax.lax.dot_general(q, k, (((1,), (1,)), ((), ())),
                             preferred_element_type=f32)        # (N, N)
    row = jax.lax.broadcasted_iota(jnp.int32, (N, N), 0)
    col = jax.lax.broadcasted_iota(jnp.int32, (N, N), 1)
    causal = col <= row
    allowed = None
    for b in range(batch):  # batch is tiny & static; pure VPU compares
        lo, hi = b * seq, (b + 1) * seq
        term = (row >= lo) & (row < hi) & (col >= lo) & causal
        allowed = term if allowed is None else (allowed | term)
    # Large finite negative (not -inf) so exp() can never produce NaN.
    sc = jnp.where(allowed, sc, -1e30)

    m = jnp.max(sc, axis=-1, keepdims=True)
    p = jnp.exp(sc - m)
    denom = jnp.sum(p, axis=-1, keepdims=True)
    attn = p / denom                               # exact divide (parity)
    ctx = jnp.dot(attn, v, preferred_element_type=f32)          # (N, 128)

    attn_out = jnp.dot(ctx, wo, preferred_element_type=f32)     # (N, D)
    attn_out = attn_out + bias_ref[4:5, 0:D]

    # ReZero residual #1 (use_LayerNorm=False; dropout = identity in eval)
    h = h + rw * attn_out

    # ---- feed-forward ----
    ff = jnp.dot(h, w1, preferred_element_type=f32) + b1_ref[...]
    ff = jnp.maximum(ff, 0.0)  # relu
    ff = jnp.dot(ff, w2, preferred_element_type=f32)            # (N, D)
    ff = ff + bias_ref[5:6, 0:D]

    # ReZero residual #2
    h = h + rw * ff

    # ---- decoder: lane-dense (N, 128) store; sliced to final_cats outside ----
    out_ref[...] = jnp.dot(h, wd, preferred_element_type=f32) + bias_ref[6:7, :]


def rezero_forward(src_bfs, kp, *, num_features, d_model, final_cats):
    """src_bfs: (B, F, S) float32, like the PyTorch module input."""
    B, F, S = src_bfs.shape
    assert F == num_features
    N = B * S

    # (B, F, S) -> (B, S, F) -> (N, F): flatten done host-side, kernel is 2-D.
    src2d = jnp.transpose(src_bfs, (0, 2, 1)).reshape(N, F)

    kernel = functools.partial(_rezero_kernel, batch=B, seq=S, d_model=d_model)

    vmem = pl.BlockSpec(memory_space=pltpu.MemorySpace.VMEM)
    smem = pl.BlockSpec(memory_space=pltpu.MemorySpace.SMEM)

    out_pad = pl.pallas_call(
        kernel,
        out_shape=jax.ShapeDtypeStruct((N, 128), jnp.float32),
        in_specs=[vmem] * 9 + [smem],
        out_specs=vmem,
    )(
        src2d,
        kp["wc"], kp["wqkv"], kp["wo_pad"],
        kp["w1"], kp["b1"], kp["w2"], kp["wd_pad"],
        kp["bias_pack"], kp["resweight"],
    )
    # Drop the zero lane padding; reshape is a free host-side op.
    return out_pad[:, :final_cats].reshape(B, S, final_cats)


def pack_params(raw, *, num_features, d_model, nhid, final_cats):
    """Fold scalings, pad to lane tiles, cast weights to bf16 (done once)."""
    assert d_model <= 128 and final_cats <= 128
    sqrt_ninp = math.sqrt(num_features)
    scale = 1.0 / math.sqrt(d_model)
    D = d_model
    bf16 = jnp.bfloat16

    # Packed QKV weight, sections lane-tile aligned at 0 / 128 / 256.
    wqkv = jnp.zeros((D, 3 * 128), jnp.float32)
    wqkv = wqkv.at[:, 0:D].set(raw["wq"] * scale)
    wqkv = wqkv.at[:, 128:128 + D].set(raw["wk"])
    wqkv = wqkv.at[:, 256:256 + D].set(raw["wv"])

    # wo padded to 128 rows so ctx(N,128) @ wo stays tile-aligned;
    # wd padded to 128 output lanes so the final store is unmasked.
    wo_pad = jnp.zeros((128, D), jnp.float32).at[0:D, :].set(raw["wo"])
    wd_pad = jnp.zeros((D, 128), jnp.float32).at[:, 0:final_cats].set(raw["wd"])

    # All small biases in one (8, 128) f32 tile; row layout documented in kernel.
    bias_pack = jnp.zeros((8, 128), jnp.float32)
    bias_pack = bias_pack.at[0, 0:D].set(raw["bc"][0] * sqrt_ninp)
    bias_pack = bias_pack.at[1, 0:D].set(raw["bq"][0] * scale)
    bias_pack = bias_pack.at[2, 0:D].set(raw["bk"][0])
    bias_pack = bias_pack.at[3, 0:D].set(raw["bv"][0])
    bias_pack = bias_pack.at[4, 0:D].set(raw["bo"][0])
    bias_pack = bias_pack.at[5, 0:D].set(raw["b2"][0])
    bias_pack = bias_pack.at[6, 0:final_cats].set(raw["bd"][0])

    return {
        "wc": (raw["wc"] * sqrt_ninp).astype(bf16),   # (F, D)
        "wqkv": wqkv.astype(bf16),                    # (D, 384)
        "wo_pad": wo_pad.astype(bf16),                # (128, D)
        "w1": raw["w1"].astype(bf16),                 # (D, nhid)
        "b1": raw["b1"],                              # (1, nhid) f32 (tiny)
        "w2": raw["w2"].astype(bf16),                 # (nhid, D) standard layout
        "wd_pad": wd_pad.astype(bf16),                # (D, 128)
        "bias_pack": bias_pack,                       # (8, 128) f32
        "resweight": raw["resweight"],                # (1, 1) f32 -> SMEM
    }


def rezero_reference(src_bfs, kp, *, d_model, final_cats):
    """Pure-JAX reference mirroring the PyTorch forward (eval mode).

    Uses the SAME bf16-rounded weights as the kernel so the comparison
    isolates kernel correctness (the bf16 weight storage itself is the
    intentional, review-recommended quantization).
    """
    B, F, S = src_bfs.shape
    D = d_model
    f32 = jnp.float32
    x = jnp.transpose(src_bfs, (2, 0, 1))  # (S, B, F)

    wc = kp["wc"].astype(f32)                      # sqrt(ninp) folded
    wqkv = kp["wqkv"].astype(f32)
    wq, wk, wv = wqkv[:, 0:D], wqkv[:, 128:128 + D], wqkv[:, 256:256 + D]
    wo = kp["wo_pad"].astype(f32)[0:D, :]
    w1 = kp["w1"].astype(f32)
    w2 = kp["w2"].astype(f32)
    wd = kp["wd_pad"].astype(f32)[:, 0:final_cats]
    bias = kp["bias_pack"]
    bc, bq, bk, bv, bo, b2 = (bias[i, 0:D] for i in range(6))
    bd = bias[6, 0:final_cats]
    b1 = kp["b1"][0]
    rw = kp["resweight"][0, 0]

    mask = jnp.where(jnp.tril(jnp.ones((S, S), dtype=bool)), 0.0, -jnp.inf)

    h = x @ wc + bc                                  # sqrt(ninp) already folded
    q = h @ wq + bq                                  # 1/sqrt(D) already folded
    k = h @ wk + bk
    v = h @ wv + bv
    scores = jnp.einsum("sbd,tbd->bst", q, k) + mask[None]
    attn = jax.nn.softmax(scores, axis=-1)
    ctx = jnp.einsum("bst,tbd->sbd", attn, v)
    attn_out = ctx @ wo + bo

    h = h + rw * attn_out
    ff = jnp.maximum(h @ w1 + b1, 0.0) @ w2 + b2
    h = h + rw * ff

    out = h @ wd + bd                                # (S, B, final_cats)
    return jnp.transpose(out, (1, 0, 2))             # (B, S, final_cats)


def init_params(key, *, num_features, d_model, nhid, final_cats):
    def xavier(k, shape):
        fan_in, fan_out = shape[0], shape[1]
        bound = math.sqrt(6.0 / (fan_in + fan_out))
        return jax.random.uniform(k, shape, jnp.float32, -bound, bound)

    ks = jax.random.split(key, 10)
    params = {
        "wc": xavier(ks[0], (num_features, d_model)),
        "bc": jnp.zeros((1, d_model), jnp.float32),
        "wq": xavier(ks[1], (d_model, d_model)),
        "bq": jnp.zeros((1, d_model), jnp.float32),
        "wk": xavier(ks[2], (d_model, d_model)),
        "bk": jnp.zeros((1, d_model), jnp.float32),
        "wv": xavier(ks[3], (d_model, d_model)),
        "bv": jnp.zeros((1, d_model), jnp.float32),
        "wo": xavier(ks[4], (d_model, d_model)),
        "bo": jnp.zeros((1, d_model), jnp.float32),
        "w1": xavier(ks[5], (d_model, nhid)),
        "b1": jnp.zeros((1, nhid), jnp.float32),
        "w2": xavier(ks[6], (nhid, d_model)),
        "b2": jnp.zeros((1, d_model), jnp.float32),
        # decoder: init_weights() -> uniform(-0.1, 0.1), zero bias
        "wd": jax.random.uniform(ks[7], (d_model, final_cats), jnp.float32, -0.1, 0.1),
        "bd": jnp.zeros((1, final_cats), jnp.float32),
        # Module default init_resweight=0 (pure identity layer); use a nonzero
        # deterministic value so the attention / FFN paths are exercised.
        "resweight": jnp.full((1, 1), 0.1, jnp.float32),
    }
    return params


if __name__ == "__main__":
    NUM_FEATURES = 22      # ninp
    D_MODEL = 36           # compress_representation
    NHID = 2048            # dim_feedforward
    FINAL_CATS = 9
    B, S = 2, 8

    key = jax.random.PRNGKey(0)
    k_x, k_p = jax.random.split(key)

    # PyTorch forward expects src of shape (B, num_features, S)
    x = jax.random.normal(k_x, (B, NUM_FEATURES, S), jnp.float32)
    raw_params = init_params(k_p, num_features=NUM_FEATURES, d_model=D_MODEL,
                             nhid=NHID, final_cats=FINAL_CATS)
    kparams = pack_params(raw_params, num_features=NUM_FEATURES, d_model=D_MODEL,
                          nhid=NHID, final_cats=FINAL_CATS)

    out = rezero_forward(x, kparams, num_features=NUM_FEATURES,
                         d_model=D_MODEL, final_cats=FINAL_CATS)
    out = jax.block_until_ready(out)

    ref = rezero_reference(x, kparams, d_model=D_MODEL, final_cats=FINAL_CATS)
    ref = jax.block_until_ready(ref)

    assert out.shape == (B, S, FINAL_CATS)
    assert jnp.allclose(out, ref, rtol=1e-3, atol=1e-3), "mismatch vs JAX reference"

    print("KERNEL_OK")
</pallas_src>

<mosaic_0001>
module attributes {stable_mosaic.version = 11 : i64} {
  func.func @_rezero_kernel(%arg0: memref<16x22xf32, #tpu.memory_space<vmem>>, %arg1: memref<22x36xbf16, #tpu.memory_space<vmem>>, %arg2: memref<36x384xbf16, #tpu.memory_space<vmem>>, %arg3: memref<128x36xbf16, #tpu.memory_space<vmem>>, %arg4: memref<36x2048xbf16, #tpu.memory_space<vmem>>, %arg5: memref<1x2048xf32, #tpu.memory_space<vmem>>, %arg6: memref<2048x36xbf16, #tpu.memory_space<vmem>>, %arg7: memref<36x128xbf16, #tpu.memory_space<vmem>>, %arg8: memref<8x128xf32, #tpu.memory_space<vmem>>, %arg9: memref<1x1xf32, #tpu.memory_space<smem>>, %arg10: memref<16x128xf32, #tpu.memory_space<vmem>>) attributes {dimension_semantics = [], scalar_prefetch = 0 : i64, scratch_operands = 0 : i64, tpu.core_type = #tpu.core_type<tc>} {
    %c0 = arith.constant 0 : index
    %c0_0 = arith.constant 0 : index
    %0 = memref.load %arg9[%c0, %c0_0] : memref<1x1xf32, #tpu.memory_space<smem>>
    %c0_1 = arith.constant 0 : index
    %c0_2 = arith.constant 0 : index
    %1 = vector.load %arg1[%c0_1, %c0_2] : memref<22x36xbf16, #tpu.memory_space<vmem>>, vector<22x36xbf16>
    %2 = arith.extf %1 : vector<22x36xbf16> to vector<22x36xf32>
    %c0_3 = arith.constant 0 : index
    %c0_4 = arith.constant 0 : index
    %3 = vector.load %arg2[%c0_3, %c0_4] : memref<36x384xbf16, #tpu.memory_space<vmem>>, vector<36x384xbf16>
    %4 = arith.extf %3 : vector<36x384xbf16> to vector<36x384xf32>
    %c0_5 = arith.constant 0 : index
    %c0_6 = arith.constant 0 : index
    %5 = vector.load %arg3[%c0_5, %c0_6] : memref<128x36xbf16, #tpu.memory_space<vmem>>, vector<128x36xbf16>
    %6 = arith.extf %5 : vector<128x36xbf16> to vector<128x36xf32>
    %c0_7 = arith.constant 0 : index
    %c0_8 = arith.constant 0 : index
    %7 = vector.load %arg4[%c0_7, %c0_8] : memref<36x2048xbf16, #tpu.memory_space<vmem>>, vector<36x2048xbf16>
    %8 = arith.extf %7 : vector<36x2048xbf16> to vector<36x2048xf32>
    %c0_9 = arith.constant 0 : index
    %c0_10 = arith.constant 0 : index
    %9 = vector.load %arg6[%c0_9, %c0_10] : memref<2048x36xbf16, #tpu.memory_space<vmem>>, vector<2048x36xbf16>
    %10 = arith.extf %9 : vector<2048x36xbf16> to vector<2048x36xf32>
    %c0_11 = arith.constant 0 : index
    %c0_12 = arith.constant 0 : index
    %11 = vector.load %arg7[%c0_11, %c0_12] : memref<36x128xbf16, #tpu.memory_space<vmem>>, vector<36x128xbf16>
    %12 = arith.extf %11 : vector<36x128xbf16> to vector<36x128xf32>
    %c0_13 = arith.constant 0 : index
    %c0_14 = arith.constant 0 : index
    %13 = vector.load %arg0[%c0_13, %c0_14] : memref<16x22xf32, #tpu.memory_space<vmem>>, vector<16x22xf32>
    %cst = arith.constant dense<0.000000e+00> : vector<16x36xf32>
    %14 = tpu.matmul %13, %2, %cst {dimension_numbers = #tpu.dot_dimension_numbers<[1], [0], [0], [1], [0, 0, 1, 1], [], []>} : vector<16x22xf32>, vector<22x36xf32>, vector<16x36xf32> -> vector<16x36xf32>
    %c0_15 = arith.constant 0 : index
    %c0_16 = arith.constant 0 : index
    %15 = vector.load %arg8[%c0_15, %c0_16] : memref<8x128xf32, #tpu.memory_space<vmem>>, vector<1x36xf32>
    %16 = vector.broadcast %15 : vector<1x36xf32> to vector<16x36xf32>
    %17 = arith.addf %14, %16 : vector<16x36xf32>
    %cst_17 = arith.constant dense<0.000000e+00> : vector<16x384xf32>
    %18 = tpu.matmul %17, %4, %cst_17 {dimension_numbers = #tpu.dot_dimension_numbers<[1], [0], [0], [1], [0, 0, 1, 1], [], []>} : vector<16x36xf32>, vector<36x384xf32>, vector<16x384xf32> -> vector<16x384xf32>
    %19 = vector.extract_strided_slice %18 {offsets = [0, 0], sizes = [16, 128], strides = [1, 1]} : vector<16x384xf32> to vector<16x128xf32>
    %c1 = arith.constant 1 : index
    %c0_18 = arith.constant 0 : index
    %20 = vector.load %arg8[%c1, %c0_18] : memref<8x128xf32, #tpu.memory_space<vmem>>, vector<1x128xf32>
    %21 = vector.broadcast %20 : vector<1x128xf32> to vector<16x128xf32>
    %22 = arith.addf %19, %21 : vector<16x128xf32>
    %23 = vector.extract_strided_slice %18 {offsets = [0, 128], sizes = [16, 128], strides = [1, 1]} : vector<16x384xf32> to vector<16x128xf32>
    %c2 = arith.constant 2 : index
    %c0_19 = arith.constant 0 : index
    %24 = vector.load %arg8[%c2, %c0_19] : memref<8x128xf32, #tpu.memory_space<vmem>>, vector<1x128xf32>
    %25 = vector.broadcast %24 : vector<1x128xf32> to vector<16x128xf32>
    %26 = arith.addf %23, %25 : vector<16x128xf32>
    %27 = vector.extract_strided_slice %18 {offsets = [0, 256], sizes = [16, 128], strides = [1, 1]} : vector<16x384xf32> to vector<16x128xf32>
    %c3 = arith.constant 3 : index
    %c0_20 = arith.constant 0 : index
    %28 = vector.load %arg8[%c3, %c0_20] : memref<8x128xf32, #tpu.memory_space<vmem>>, vector<1x128xf32>
    %29 = vector.broadcast %28 : vector<1x128xf32> to vector<16x128xf32>
    %30 = arith.addf %27, %29 : vector<16x128xf32>
    %cst_21 = arith.constant dense<0.000000e+00> : vector<16x16xf32>
    %31 = tpu.matmul %22, %26, %cst_21 {dimension_numbers = #tpu.dot_dimension_numbers<[1], [1], [0], [0], [0, 0, 1, 0], [], []>} : vector<16x128xf32>, vector<16x128xf32>, vector<16x16xf32> -> vector<16x16xf32>
    %32 = tpu.iota {dimensions = array<i32: 0>} : vector<16x16xi32>
    %33 = tpu.iota {dimensions = array<i32: 1>} : vector<16x16xi32>
    %34 = arith.cmpi sle, %33, %32 : vector<16x16xi32>
    %c0_i32 = arith.constant 0 : i32
    %35 = vector.broadcast %c0_i32 : i32 to vector<16x16xi32>
    %36 = arith.cmpi sge, %32, %35 : vector<16x16xi32>
    %c8_i32 = arith.constant 8 : i32
    %37 = vector.broadcast %c8_i32 : i32 to vector<16x16xi32>
    %38 = arith.cmpi slt, %32, %37 : vector<16x16xi32>
    %39 = arith.andi %36, %38 : vector<16x16xi1>
    %c0_i32_22 = arith.constant 0 : i32
    %40 = vector.broadcast %c0_i32_22 : i32 to vector<16x16xi32>
    %41 = arith.cmpi sge, %33, %40 : vector<16x16xi32>
    %42 = arith.andi %39, %41 : vector<16x16xi1>
    %43 = arith.andi %42, %34 : vector<16x16xi1>
    %c8_i32_23 = arith.constant 8 : i32
    %44 = vector.broadcast %c8_i32_23 : i32 to vector<16x16xi32>
    %45 = arith.cmpi sge, %32, %44 : vector<16x16xi32>
    %c16_i32 = arith.constant 16 : i32
    %46 = vector.broadcast %c16_i32 : i32 to vector<16x16xi32>
    %47 = arith.cmpi slt, %32, %46 : vector<16x16xi32>
    %48 = arith.andi %45, %47 : vector<16x16xi1>
    %c8_i32_24 = arith.constant 8 : i32
    %49 = vector.broadcast %c8_i32_24 : i32 to vector<16x16xi32>
    %50 = arith.cmpi sge, %33, %49 : vector<16x16xi32>
    %51 = arith.andi %48, %50 : vector<16x16xi1>
    %52 = arith.andi %51, %34 : vector<16x16xi1>
    %53 = arith.ori %43, %52 : vector<16x16xi1>
    %cst_25 = arith.constant -1.000000e+30 : f32
    %54 = vector.broadcast %cst_25 : f32 to vector<16x16xf32>
    %55 = arith.select %53, %31, %54 : vector<16x16xi1>, vector<16x16xf32>
    %cst_26 = arith.constant dense<0xFF800000> : vector<16xf32>
    %56 = vector.multi_reduction <maximumf>, %55, %cst_26 [1] : vector<16x16xf32> to vector<16xf32>
    %57 = vector.shape_cast %56 : vector<16xf32> to vector<16x1xf32>
    %58 = vector.broadcast %57 : vector<16x1xf32> to vector<16x16xf32>
    %59 = arith.subf %55, %58 : vector<16x16xf32>
    %60 = math.exp %59 : vector<16x16xf32>
    %cst_27 = arith.constant dense<0.000000e+00> : vector<16xf32>
    %61 = vector.multi_reduction <add>, %60, %cst_27 [1] : vector<16x16xf32> to vector<16xf32>
    %62 = vector.shape_cast %61 : vector<16xf32> to vector<16x1xf32>
    %63 = vector.broadcast %62 : vector<16x1xf32> to vector<16x16xf32>
    %64 = arith.divf %60, %63 : vector<16x16xf32>
    %cst_28 = arith.constant dense<0.000000e+00> : vector<16x128xf32>
    %65 = tpu.matmul %64, %30, %cst_28 {dimension_numbers = #tpu.dot_dimension_numbers<[1], [0], [0], [1], [0, 0, 1, 1], [], []>} : vector<16x16xf32>, vector<16x128xf32>, vector<16x128xf32> -> vector<16x128xf32>
    %cst_29 = arith.constant dense<0.000000e+00> : vector<16x36xf32>
    %66 = tpu.matmul %65, %6, %cst_29 {dimension_numbers = #tpu.dot_dimension_numbers<[1], [0], [0], [1], [0, 0, 1, 1], [], []>} : vector<16x128xf32>, vector<128x36xf32>, vector<16x36xf32> -> vector<16x36xf32>
    %c4 = arith.constant 4 : index
    %c0_30 = arith.constant 0 : index
    %67 = vector.load %arg8[%c4, %c0_30] : memref<8x128xf32, #tpu.memory_space<vmem>>, vector<1x36xf32>
    %68 = vector.broadcast %67 : vector<1x36xf32> to vector<16x36xf32>
    %69 = arith.addf %66, %68 : vector<16x36xf32>
    %70 = vector.broadcast %0 : f32 to vector<16x36xf32>
    %71 = arith.mulf %70, %69 : vector<16x36xf32>
    %72 = arith.addf %17, %71 : vector<16x36xf32>
    %cst_31 = arith.constant dense<0.000000e+00> : vector<16x2048xf32>
    %73 = tpu.matmul %72, %8, %cst_31 {dimension_numbers = #tpu.dot_dimension_numbers<[1], [0], [0], [1], [0, 0, 1, 1], [], []>} : vector<16x36xf32>, vector<36x2048xf32>, vector<16x2048xf32> -> vector<16x2048xf32>
    %c0_32 = arith.constant 0 : index
    %c0_33 = arith.constant 0 : index
    %74 = vector.load %arg5[%c0_32, %c0_33] : memref<1x2048xf32, #tpu.memory_space<vmem>>, vector<1x2048xf32>
    %75 = vector.broadcast %74 : vector<1x2048xf32> to vector<16x2048xf32>
    %76 = arith.addf %73, %75 : vector<16x2048xf32>
    %cst_34 = arith.constant 0.000000e+00 : f32
    %77 = vector.broadcast %cst_34 : f32 to vector<16x2048xf32>
    %78 = arith.maximumf %76, %77 : vector<16x2048xf32>
    %cst_35 = arith.constant dense<0.000000e+00> : vector<16x36xf32>
    %79 = tpu.matmul %78, %10, %cst_35 {dimension_numbers = #tpu.dot_dimension_numbers<[1], [0], [0], [1], [0, 0, 1, 1], [], []>} : vector<16x2048xf32>, vector<2048x36xf32>, vector<16x36xf32> -> vector<16x36xf32>
    %c5 = arith.constant 5 : index
    %c0_36 = arith.constant 0 : index
    %80 = vector.load %arg8[%c5, %c0_36] : memref<8x128xf32, #tpu.memory_space<vmem>>, vector<1x36xf32>
    %81 = vector.broadcast %80 : vector<1x36xf32> to vector<16x36xf32>
    %82 = arith.addf %79, %81 : vector<16x36xf32>
    %83 = vector.broadcast %0 : f32 to vector<16x36xf32>
    %84 = arith.mulf %83, %82 : vector<16x36xf32>
    %85 = arith.addf %72, %84 : vector<16x36xf32>
    %cst_37 = arith.constant dense<0.000000e+00> : vector<16x128xf32>
    %86 = tpu.matmul %85, %12, %cst_37 {dimension_numbers = #tpu.dot_dimension_numbers<[1], [0], [0], [1], [0, 0, 1, 1], [], []>} : vector<16x36xf32>, vector<36x128xf32>, vector<16x128xf32> -> vector<16x128xf32>
    %c6 = arith.constant 6 : index
    %c0_38 = arith.constant 0 : index
    %87 = vector.load %arg8[%c6, %c0_38] : memref<8x128xf32, #tpu.memory_space<vmem>>, vector<1x128xf32>
    %88 = vector.broadcast %87 : vector<1x128xf32> to vector<16x128xf32>
    %89 = arith.addf %86, %88 : vector<16x128xf32>
    %c0_39 = arith.constant 0 : index
    %c0_40 = arith.constant 0 : index
    %90 = vector.load %arg10[%c0_39, %c0_40] : memref<16x128xf32, #tpu.memory_space<vmem>>, vector<16x128xf32>
    tpu.vector_store %arg10[%c0_39, %c0_40], %89 {strides = array<i32>} : memref<16x128xf32, #tpu.memory_space<vmem>>, vector<16x128xf32>,
    return
  }
}

</mosaic_0001>

<llo_original>
// kernel: tpu_custom_call.1
$region0: #{tpu_custom_call.1}
  #allocation0 [shape = 'u32[]', space=smem, size = 0x4, offset = 0x4, fixed_abs, tag = 'smem constant byte address 0x4 - core index']
  #allocation1 [shape = 'u32[144,128]{1,0:T(1,128)}', space=vmem, size = 0x12000, scoped, tag = 'internal scratch']
  #allocation2 [shape = 'f32[1,1]{1,0:T(1,128)S(6)}', space=smem, size = 0x200, scoped, tag = 'scoped memory for tpu_custom_call.1']
  %s0 = inlined_call_operand.vmem [shape: f32[16,22], index: 0, kind: input, shape index: {}]
  %s1 = inlined_call_operand.vmem [shape: bf16[22,36], index: 1, kind: input, shape index: {}]
  %s2 = inlined_call_operand.vmem [shape: bf16[36,384], index: 2, kind: input, shape index: {}]
  %s3 = inlined_call_operand.vmem [shape: bf16[128,36], index: 3, kind: input, shape index: {}]
  %s4 = inlined_call_operand.vmem [shape: bf16[36,2048], index: 4, kind: input, shape index: {}]
  %s5 = inlined_call_operand.vmem [shape: f32[1,2048], index: 5, kind: input, shape index: {}]
  %s6 = inlined_call_operand.vmem [shape: bf16[2048,36], index: 6, kind: input, shape index: {}]
  %s7 = inlined_call_operand.vmem [shape: bf16[36,128], index: 7, kind: input, shape index: {}]
  %s8 = inlined_call_operand.vmem [shape: f32[8,128], index: 8, kind: input, shape index: {}]
  %s9 = inlined_call_operand.<no memory space> [shape: f32[1,1], index: 9, kind: input, shape index: {}]
  %s10 = inlined_call_operand.hbm [shape: f32[16,128], index: 10, kind: output, shape index: {}]
  %s11 = sld [smem:[#allocation0]]
  $region50: #{tpu_custom_call.1} parent=0
    _
  %s13 = ssub.s32 1, %s11
  %s14 = scalar_select 0, %s13, %s11
  %15 = sst [smem:[#allocation2]] %s9
  $region1: #{tpu_custom_call.1} parent=0
    #allocation3 [shape = 'u8[8192]{0}', space=vmem, size = 0x2000, scoped, tag = 'output window, operand 0, single buffered']
    #allocation4 [shape = 's32[1]{0}', space=sflag, size = 0x4, scoped, tag = 'scoped memory for tpu_custom_call.1']
    %16 = vsyncpa [#allocation4], 0
    // Predicated region
    $region2: #{tpu_custom_call.1} parent=1 // pred_check
      _
    $region3: #{tpu_custom_call.1} parent=1 // pred_check_branch
      %18 = sbr.rel (0) target = $region5
    $region4: #{tpu_custom_call.1} parent=1 // pred_region
      _
    $region5: #{tpu_custom_call.1} parent=1 // pred_fallthru
      _
    // Predicated region
    $region6: #{tpu_custom_call.1} parent=1 // pred_check
      _
    $region7: #{tpu_custom_call.1} parent=1 // pred_check_branch
      %20 = sbr.rel (0) target = $region9
    $region8: #{tpu_custom_call.1} parent=1 // pred_region
      _
    $region9: #{tpu_custom_call.1} parent=1 // pred_fallthru
      _
    // Predicated region
    $region10: #{tpu_custom_call.1} parent=1 // pred_check
      _
    $region11: #{tpu_custom_call.1} parent=1 // pred_check_branch
      %22 = sbr.rel (0) target = $region13
    $region12: #{tpu_custom_call.1} parent=1 // pred_region
      _
    $region13: #{tpu_custom_call.1} parent=1 // pred_fallthru
      _
    // Predicated region
    $region14: #{tpu_custom_call.1} parent=1 // pred_check
      _
    $region15: #{tpu_custom_call.1} parent=1 // pred_check_branch
      %24 = sbr.rel (0) target = $region17
    $region16: #{tpu_custom_call.1} parent=1 // pred_region
      _
    $region17: #{tpu_custom_call.1} parent=1 // pred_fallthru
      _
    // Predicated region
    $region18: #{tpu_custom_call.1} parent=1 // pred_check
      _
    $region19: #{tpu_custom_call.1} parent=1 // pred_check_branch
      %26 = sbr.rel (0) target = $region21
    $region20: #{tpu_custom_call.1} parent=1 // pred_region
      _
    $region21: #{tpu_custom_call.1} parent=1 // pred_fallthru
      _
    // Predicated region
    $region22: #{tpu_custom_call.1} parent=1 // pred_check
      _
    $region23: #{tpu_custom_call.1} parent=1 // pred_check_branch
      %28 = sbr.rel (0) target = $region25
    $region24: #{tpu_custom_call.1} parent=1 // pred_region
      _
    $region25: #{tpu_custom_call.1} parent=1 // pred_fallthru
      _
    // Predicated region
    $region26: #{tpu_custom_call.1} parent=1 // pred_check
      _
    $region27: #{tpu_custom_call.1} parent=1 // pred_check_branch
      %30 = sbr.rel (0) target = $region29
    $region28: #{tpu_custom_call.1} parent=1 // pred_region
      _
    $region29: #{tpu_custom_call.1} parent=1 // pred_fallthru
      _
    // Predicated region
    $region30: #{tpu_custom_call.1} parent=1 // pred_check
      _
    $region31: #{tpu_custom_call.1} parent=1 // pred_check_branch
      %32 = sbr.rel (0) target = $region33
    $region32: #{tpu_custom_call.1} parent=1 // pred_region
      _
    $region33: #{tpu_custom_call.1} parent=1 // pred_fallthru
      _
    // Predicated region
    $region34: #{tpu_custom_call.1} parent=1 // pred_check
      _
    $region35: #{tpu_custom_call.1} parent=1 // pred_check_branch
      %34 = sbr.rel (0) target = $region37
    $region36: #{tpu_custom_call.1} parent=1 // pred_region
      _
    $region37: #{tpu_custom_call.1} parent=1 // pred_fallthru
      _
    // Predicated region
    $region38: #{tpu_custom_call.1} parent=1 // pred_check
      _
    $region39: #{tpu_custom_call.1} parent=1 // pred_check_branch
      %36 = sbr.rel (0) target = $region41
    $region40: #{tpu_custom_call.1} parent=1 // pred_region
      _
    $region41: #{tpu_custom_call.1} parent=1 // pred_fallthru
      _
    %s37 = sld [smem:[#allocation2]]
    %v38 = vld [vmem:[%s1] sm:$0xf]
    %v39 = vld [vmem:[%s1 + $0x4] sm:$0xf]
    %v40 = vld [vmem:[%s1 + $0x8] sm:$0x7]
    %v41 = vunpack.c.l.bf16 %v38
    %v42 = vunpack.c.l.bf16 %v39
    %v43 = vunpack.c.l.bf16 %v40
    %v44 = vld [vmem:[%s2] sm:$0xff]
    %v45 = vld [vmem:[%s2 + $0x8] sm:$0xf]
    %v46 = vld [vmem:[%s2 + $0xc] sm:$0xff]
    %v47 = vld [vmem:[%s2 + $0x14] sm:$0xf]
    %v48 = vld [vmem:[%s2 + $0x18] sm:$0xff]
    %v49 = vld [vmem:[%s2 + $0x20] sm:$0xf]
    %v50 = vld [vmem:[%s2 + $0x24] sm:$0xff]
    %v51 = vld [vmem:[%s2 + $0x2c] sm:$0xf]
    %v52 = vld [vmem:[%s2 + $0x30] sm:$0x33]
    %v53 = vld [vmem:[%s2 + $0x38] sm:$0x3]
    %v54 = vunpack.c.l.bf16 %v44
    %v55 = vunpack.c.h.bf16 %v44
    %v56 = vunpack.c.l.bf16 %v45
    %v57 = vunpack.c.l.bf16 %v46
    %v58 = vunpack.c.h.bf16 %v46
    %v59 = vunpack.c.l.bf16 %v47
    %v60 = vunpack.c.l.bf16 %v48
    %v61 = vunpack.c.h.bf16 %v48
    %v62 = vunpack.c.l.bf16 %v49
    %v63 = vunpack.c.l.bf16 %v50
    %v64 = vunpack.c.h.bf16 %v50
    %v65 = vunpack.c.l.bf16 %v51
    %v66 = vunpack.c.l.bf16 %v52
    %v67 = vunpack.c.h.bf16 %v52
    %v68 = vunpack.c.l.bf16 %v53
    %v69 = vld [vmem:[%s3] sm:$0xf]
    %v70 = vld [vmem:[%s3 + $0x4] sm:$0xf]
    %v71 = vld [vmem:[%s3 + $0x8] sm:$0xf]
    %v72 = vld [vmem:[%s3 + $0xc] sm:$0xf]
    %v73 = vld [vmem:[%s3 + $0x10] sm:$0xf]
    %v74 = vld [vmem:[%s3 + $0x14] sm:$0xf]
    %v75 = vld [vmem:[%s3 + $0x18] sm:$0xf]
    %v76 = vld [vmem:[%s3 + $0x1c] sm:$0xf]
    %v77 = vld [vmem:[%s3 + $0x20] sm:$0xf]
    %v78 = vld [vmem:[%s3 + $0x24] sm:$0xf]
    %v79 = vld [vmem:[%s3 + $0x28] sm:$0xf]
    %v80 = vld [vmem:[%s3 + $0x2c] sm:$0xf]
    %v81 = vld [vmem:[%s3 + $0x30] sm:$0xf]
    %v82 = vld [vmem:[%s3 + $0x34] sm:$0xf]
    %v83 = vld [vmem:[%s3 + $0x38] sm:$0xf]
    %v84 = vld [vmem:[%s3 + $0x3c] sm:$0xf]
    %v85 = vunpack.c.l.bf16 %v69
    %v86 = vunpack.c.l.bf16 %v70
    %v87 = vunpack.c.l.bf16 %v71
    %v88 = vunpack.c.l.bf16 %v72
    %v89 = vunpack.c.l.bf16 %v73
    %v90 = vunpack.c.l.bf16 %v74
    %v91 = vunpack.c.l.bf16 %v75
    %v92 = vunpack.c.l.bf16 %v76
    %v93 = vunpack.c.l.bf16 %v77
    %v94 = vunpack.c.l.bf16 %v78
    %v95 = vunpack.c.l.bf16 %v79
    %v96 = vunpack.c.l.bf16 %v80
    %v97 = vunpack.c.l.bf16 %v81
    %v98 = vunpack.c.l.bf16 %v82
    %v99 = vunpack.c.l.bf16 %v83
    %v100 = vunpack.c.l.bf16 %v84
    %v101 = vld [vmem:[%s4] sm:$0xff]
    %v102 = vld [vmem:[%s4 + $0x8] sm:$0xff]
    %v103 = vld [vmem:[%s4 + $0x10] sm:$0xff]
    %v104 = vld [vmem:[%s4 + $0x18] sm:$0xff]
    %v105 = vld [vmem:[%s4 + $0x20] sm:$0xff]
    %v106 = vld [vmem:[%s4 + $0x28] sm:$0xff]
    %v107 = vld [vmem:[%s4 + $0x30] sm:$0xff]
    %v108 = vld [vmem:[%s4 + $0x38] sm:$0xff]
    %v109 = vld [vmem:[%s4 + $0x40] sm:$0xff]
    %v110 = vld [vmem:[%s4 + $0x48] sm:$0xff]
    %v111 = vld [vmem:[%s4 + $0x50] sm:$0xff]
    %v112 = vld [vmem:[%s4 + $0x58] sm:$0xff]
    %v113 = vld [vmem:[%s4 + $0x60] sm:$0xff]
    %v114 = vld [vmem:[%s4 + $0x68] sm:$0xff]
    %v115 = vld [vmem:[%s4 + $0x70] sm:$0xff]
    %v116 = vld [vmem:[%s4 + $0x78] sm:$0xff]
    %v117 = vld [vmem:[%s4 + $0x80] sm:$0xff]
    %v118 = vld [vmem:[%s4 + $0x88] sm:$0xff]
    %v119 = vld [vmem:[%s4 + $0x90] sm:$0xff]
    %v120 = vld [vmem:[%s4 + $0x98] sm:$0xff]
    %v121 = vld [vmem:[%s4 + $0xa0] sm:$0xff]
    %v122 = vld [vmem:[%s4 + $0xa8] sm:$0xff]
    %v123 = vld [vmem:[%s4 + $0xb0] sm:$0xff]
    %v124 = vld [vmem:[%s4 + $0xb8] sm:$0xff]
    %v125 = vld [vmem:[%s4 + $0xc0] sm:$0xff]
    %v126 = vld [vmem:[%s4 + $0xc8] sm:$0xff]
    %v127 = vld [vmem:[%s4 + $0xd0] sm:$0xff]
    %v128 = vld [vmem:[%s4 + $0xd8] sm:$0xff]
    %v129 = vld [vmem:[%s4 + $0xe0] sm:$0xff]
    %v130 = vld [vmem:[%s4 + $0xe8] sm:$0xff]
    %v131 = vld [vmem:[%s4 + $0xf0] sm:$0xff]
    %v132 = vld [vmem:[%s4 + $0xf8] sm:$0xff]
    %v133 = vld [vmem:[%s4 + $0x100] sm:$0x33]
    %v134 = vld [vmem:[%s4 + $0x108] sm:$0x33]
    %v135 = vld [vmem:[%s4 + $0x110] sm:$0x33]
    %v136 = vld [vmem:[%s4 + $0x118] sm:$0x33]
    %v137 = vld [vmem:[%s4 + $0x120] sm:$0x33]
    %v138 = vld [vmem:[%s4 + $0x128] sm:$0x33]
    %v139 = vld [vmem:[%s4 + $0x130] sm:$0x33]
    %v140 = vld [vmem:[%s4 + $0x138] sm:$0x33]
    %v141 = vunpack.c.l.bf16 %v101
    %v142 = vunpack.c.h.bf16 %v101
    %v143 = vunpack.c.l.bf16 %v102
    %v144 = vunpack.c.h.bf16 %v102
    %v145 = vunpack.c.l.bf16 %v103
    %v146 = vunpack.c.h.bf16 %v103
    %v147 = vunpack.c.l.bf16 %v104
    %v148 = vunpack.c.h.bf16 %v104
    %v149 = vunpack.c.l.bf16 %v105
    %v150 = vunpack.c.h.bf16 %v105
    %v151 = vunpack.c.l.bf16 %v106
    %v152 = vunpack.c.h.bf16 %v106
    %v153 = vunpack.c.l.bf16 %v107
    %v154 = vunpack.c.h.bf16 %v107
    %v155 = vunpack.c.l.bf16 %v108
    %v156 = vunpack.c.h.bf16 %v108
    %v157 = vunpack.c.l.bf16 %v109
    %v158 = vunpack.c.h.bf16 %v109
    %v159 = vunpack.c.l.bf16 %v110
    %v160 = vunpack.c.h.bf16 %v110
    %v161 = vunpack.c.l.bf16 %v111
    %v162 = vunpack.c.h.bf16 %v111
    %v163 = vunpack.c.l.bf16 %v112
    %v164 = vunpack.c.h.bf16 %v112
    %v165 = vunpack.c.l.bf16 %v113
    %v166 = vunpack.c.h.bf16 %v113
    %v167 = vunpack.c.l.bf16 %v114
    %v168 = vunpack.c.h.bf16 %v114
    %v169 = vunpack.c.l.bf16 %v115
    %v170 = vunpack.c.h.bf16 %v115
    %v171 = vunpack.c.l.bf16 %v116
    %v172 = vunpack.c.h.bf16 %v116
    %v173 = vunpack.c.l.bf16 %v117
    %v174 = vunpack.c.h.bf16 %v117
    %v175 = vunpack.c.l.bf16 %v118
    %v176 = vunpack.c.h.bf16 %v118
    %v177 = vunpack.c.l.bf16 %v119
    %v178 = vunpack.c.h.bf16 %v119
    %v179 = vunpack.c.l.bf16 %v120
    %v180 = vunpack.c.h.bf16 %v120
    %v181 = vunpack.c.l.bf16 %v121
    %v182 = vunpack.c.h.bf16 %v121
    %v183 = vunpack.c.l.bf16 %v122
    %v184 = vunpack.c.h.bf16 %v122
    %v185 = vunpack.c.l.bf16 %v123
    %v186 = vunpack.c.h.bf16 %v123
    %v187 = vunpack.c.l.bf16 %v124
    %v188 = vunpack.c.h.bf16 %v124
    %v189 = vunpack.c.l.bf16 %v125
    %v190 = vunpack.c.h.bf16 %v125
    %v191 = vunpack.c.l.bf16 %v126
    %v192 = vunpack.c.h.bf16 %v126
    %v193 = vunpack.c.l.bf16 %v127
    %v194 = vunpack.c.h.bf16 %v127
    %v195 = vunpack.c.l.bf16 %v128
    %v196 = vunpack.c.h.bf16 %v128
    %v197 = vunpack.c.l.bf16 %v129
    %v198 = vunpack.c.h.bf16 %v129
    %v199 = vunpack.c.l.bf16 %v130
    %v200 = vunpack.c.h.bf16 %v130
    %v201 = vunpack.c.l.bf16 %v131
    %v202 = vunpack.c.h.bf16 %v131
    %v203 = vunpack.c.l.bf16 %v132
    %v204 = vunpack.c.h.bf16 %v132
    %v205 = vunpack.c.l.bf16 %v133
    %v206 = vunpack.c.h.bf16 %v133
    %v207 = vunpack.c.l.bf16 %v134
    %v208 = vunpack.c.h.bf16 %v134
    %v209 = vunpack.c.l.bf16 %v135
    %v210 = vunpack.c.h.bf16 %v135
    %v211 = vunpack.c.l.bf16 %v136
    %v212 = vunpack.c.h.bf16 %v136
    %v213 = vunpack.c.l.bf16 %v137
    %v214 = vunpack.c.h.bf16 %v137
    %v215 = vunpack.c.l.bf16 %v138
    %v216 = vunpack.c.h.bf16 %v138
    %v217 = vunpack.c.l.bf16 %v139
    %v218 = vunpack.c.h.bf16 %v139
    %v219 = vunpack.c.l.bf16 %v140
    %v220 = vunpack.c.h.bf16 %v140
    %v221 = vld [vmem:[%s6] sm:$0xf]
    %v222 = vld [vmem:[%s6 + $0x4] sm:$0xf]
    %v223 = vld [vmem:[%s6 + $0x8] sm:$0xf]
    %v224 = vld [vmem:[%s6 + $0xc] sm:$0xf]
    %v225 = vld [vmem:[%s6 + $0x10] sm:$0xf]
    %v226 = vld [vmem:[%s6 + $0x14] sm:$0xf]
    %v227 = vld [vmem:[%s6 + $0x18] sm:$0xf]
    %v228 = vld [vmem:[%s6 + $0x1c] sm:$0xf]
    %v229 = vld [vmem:[%s6 + $0x20] sm:$0xf]
    %v230 = vld [vmem:[%s6 + $0x24] sm:$0xf]
    %v231 = vld [vmem:[%s6 + $0x28] sm:$0xf]
    %v232 = vld [vmem:[%s6 + $0x2c] sm:$0xf]
    %v233 = vld [vmem:[%s6 + $0x30] sm:$0xf]
    %v234 = vld [vmem:[%s6 + $0x34] sm:$0xf]
    %v235 = vld [vmem:[%s6 + $0x38] sm:$0xf]
    %v236 = vld [vmem:[%s6 + $0x3c] sm:$0xf]
    %v237 = vld [vmem:[%s6 + $0x40] sm:$0xf]
    %v238 = vld [vmem:[%s6 + $0x44] sm:$0xf]
    %v239 = vld [vmem:[%s6 + $0x48] sm:$0xf]
    %v240 = vld [vmem:[%s6 + $0x4c] sm:$0xf]
    %v241 = vld [vmem:[%s6 + $0x50] sm:$0xf]
    %v242 = vld [vmem:[%s6 + $0x54] sm:$0xf]
    %v243 = vld [vmem:[%s6 + $0x58] sm:$0xf]
    %v244 = vld [vmem:[%s6 + $0x5c] sm:$0xf]
    %v245 = vld [vmem:[%s6 + $0x60] sm:$0xf]
    %v246 = vld [vmem:[%s6 + $0x64] sm:$0xf]
    %v247 = vld [vmem:[%s6 + $0x68] sm:$0xf]
    %v248 = vld [vmem:[%s6 + $0x6c] sm:$0xf]
    %v249 = vld [vmem:[%s6 + $0x70] sm:$0xf]
    %v250 = vld [vmem:[%s6 + $0x74] sm:$0xf]
    %v251 = vld [vmem:[%s6 + $0x78] sm:$0xf]
    %v252 = vld [vmem:[%s6 + $0x7c] sm:$0xf]
    %v253 = vld [vmem:[%s6 + $0x80] sm:$0xf]
    %v254 = vld [vmem:[%s6 + $0x84] sm:$0xf]
    %v255 = vld [vmem:[%s6 + $0x88] sm:$0xf]
    %v256 = vld [vmem:[%s6 + $0x8c] sm:$0xf]
    %v257 = vld [vmem:[%s6 + $0x90] sm:$0xf]
    %v258 = vld [vmem:[%s6 + $0x94] sm:$0xf]
    %v259 = vld [vmem:[%s6 + $0x98] sm:$0xf]
    %v260 = vld [vmem:[%s6 + $0x9c] sm:$0xf]
    %v261 = vld [vmem:[%s6 + $0xa0] sm:$0xf]
    %v262 = vld [vmem:[%s6 + $0xa4] sm:$0xf]
    %v263 = vld [vmem:[%s6 + $0xa8] sm:$0xf]
    %v264 = vld [vmem:[%s6 + $0xac] sm:$0xf]
    %v265 = vld [vmem:[%s6 + $0xb0] sm:$0xf]
    %v266 = vld [vmem:[%s6 + $0xb4] sm:$0xf]
    %v267 = vld [vmem:[%s6 + $0xb8] sm:$0xf]
    %v268 = vld [vmem:[%s6 + $0xbc] sm:$0xf]
    %v269 = vld [vmem:[%s6 + $0xc0] sm:$0xf]
    %v270 = vld [vmem:[%s6 + $0xc4] sm:$0xf]
    %v271 = vld [vmem:[%s6 + $0xc8] sm:$0xf]
    %v272 = vld [vmem:[%s6 + $0xcc] sm:$0xf]
    %v273 = vld [vmem:[%s6 + $0xd0] sm:$0xf]
    %v274 = vld [vmem:[%s6 + $0xd4] sm:$0xf]
    %v275 = vld [vmem:[%s6 + $0xd8] sm:$0xf]
    %v276 = vld [vmem:[%s6 + $0xdc] sm:$0xf]
    %v277 = vld [vmem:[%s6 + $0xe0] sm:$0xf]
    %v278 = vld [vmem:[%s6 + $0xe4] sm:$0xf]
    %v279 = vld [vmem:[%s6 + $0xe8] sm:$0xf]
    %v280 = vld [vmem:[%s6 + $0xec] sm:$0xf]
    %v281 = vld [vmem:[%s6 + $0xf0] sm:$0xf]
    %v282 = vld [vmem:[%s6 + $0xf4] sm:$0xf]
    %v283 = vld [vmem:[%s6 + $0xf8] sm:$0xf]
    %v284 = vld [vmem:[%s6 + $0xfc] sm:$0xf]
    %v285 = vld [vmem:[%s6 + $0x100] sm:$0xf]
    %v286 = vld [vmem:[%s6 + $0x104] sm:$0xf]
    %v287 = vld [vmem:[%s6 + $0x108] sm:$0xf]
    %v288 = vld [vmem:[%s6 + $0x10c] sm:$0xf]
    %v289 = vld [vmem:[%s6 + $0x110] sm:$0xf]
    %v290 = vld [vmem:[%s6 + $0x114] sm:$0xf]
    %v291 = vld [vmem:[%s6 + $0x118] sm:$0xf]
    %v292 = vld [vmem:[%s6 + $0x11c] sm:$0xf]
    %v293 = vld [vmem:[%s6 + $0x120] sm:$0xf]
    %v294 = vld [vmem:[%s6 + $0x124] sm:$0xf]
    %v295 = vld [vmem:[%s6 + $0x128] sm:$0xf]
    %v296 = vld [vmem:[%s6 + $0x12c] sm:$0xf]
    %v297 = vld [vmem:[%s6 + $0x130] sm:$0xf]
    %v298 = vld [vmem:[%s6 + $0x134] sm:$0xf]
    %v299 = vld [vmem:[%s6 + $0x138] sm:$0xf]
    %v300 = vld [vmem:[%s6 + $0x13c] sm:$0xf]
    %v301 = vld [vmem:[%s6 + $0x140] sm:$0xf]
    %v302 = vld [vmem:[%s6 + $0x144] sm:$0xf]
    %v303 = vld [vmem:[%s6 + $0x148] sm:$0xf]
    %v304 = vld [vmem:[%s6 + $0x14c] sm:$0xf]
    %v305 = vld [vmem:[%s6 + $0x150] sm:$0xf]
    %v306 = vld [vmem:[%s6 + $0x154] sm:$0xf]
    %v307 = vld [vmem:[%s6 + $0x158] sm:$0xf]
    %v308 = vld [vmem:[%s6 + $0x15c] sm:$0xf]
    %v309 = vld [vmem:[%s6 + $0x160] sm:$0xf]
    %v310 = vld [vmem:[%s6 + $0x164] sm:$0xf]
    %v311 = vld [vmem:[%s6 + $0x168] sm:$0xf]
    %v312 = vld [vmem:[%s6 + $0x16c] sm:$0xf]
    %v313 = vld [vmem:[%s6 + $0x170] sm:$0xf]
    %v314 = vld [vmem:[%s6 + $0x174] sm:$0xf]
    %v315 = vld [vmem:[%s6 + $0x178] sm:$0xf]
    %v316 = vld [vmem:[%s6 + $0x17c] sm:$0xf]
    %v317 = vld [vmem:[%s6 + $0x180] sm:$0xf]
    %v318 = vld [vmem:[%s6 + $0x184] sm:$0xf]
    %v319 = vld [vmem:[%s6 + $0x188] sm:$0xf]
    %v320 = vld [vmem:[%s6 + $0x18c] sm:$0xf]
    %v321 = vld [vmem:[%s6 + $0x190] sm:$0xf]
    %v322 = vld [vmem:[%s6 + $0x194] sm:$0xf]
    %v323 = vld [vmem:[%s6 + $0x198] sm:$0xf]
    %v324 = vld [vmem:[%s6 + $0x19c] sm:$0xf]
    %v325 = vld [vmem:[%s6 + $0x1a0] sm:$0xf]
    %v326 = vld [vmem:[%s6 + $0x1a4] sm:$0xf]
    %v327 = vld [vmem:[%s6 + $0x1a8] sm:$0xf]
    %v328 = vld [vmem:[%s6 + $0x1ac] sm:$0xf]
    %v329 = vld [vmem:[%s6 + $0x1b0] sm:$0xf]
    %v330 = vld [vmem:[%s6 + $0x1b4] sm:$0xf]
    %v331 = vld [vmem:[%s6 + $0x1b8] sm:$0xf]
    %v332 = vld [vmem:[%s6 + $0x1bc] sm:$0xf]
    %v333 = vld [vmem:[%s6 + $0x1c0] sm:$0xf]
    %v334 = vld [vmem:[%s6 + $0x1c4] sm:$0xf]
    %v335 = vld [vmem:[%s6 + $0x1c8] sm:$0xf]
    %v336 = vld [vmem:[%s6 + $0x1cc] sm:$0xf]
    %v337 = vld [vmem:[%s6 + $0x1d0] sm:$0xf]
    %v338 = vld [vmem:[%s6 + $0x1d4] sm:$0xf]
    %v339 = vld [vmem:[%s6 + $0x1d8] sm:$0xf]
    %v340 = vld [vmem:[%s6 + $0x1dc] sm:$0xf]
    %v341 = vld [vmem:[%s6 + $0x1e0] sm:$0xf]
    %v342 = vld [vmem:[%s6 + $0x1e4] sm:$0xf]
    %v343 = vld [vmem:[%s6 + $0x1e8] sm:$0xf]
    %v344 = vld [vmem:[%s6 + $0x1ec] sm:$0xf]
    %v345 = vld [vmem:[%s6 + $0x1f0] sm:$0xf]
    %v346 = vld [vmem:[%s6 + $0x1f4] sm:$0xf]
    %v347 = vld [vmem:[%s6 + $0x1f8] sm:$0xf]
    %v348 = vld [vmem:[%s6 + $0x1fc] sm:$0xf]
    %v349 = vld [vmem:[%s6 + $0x200] sm:$0xf]
    %v350 = vld [vmem:[%s6 + $0x204] sm:$0xf]
    %v351 = vld [vmem:[%s6 + $0x208] sm:$0xf]
    %v352 = vld [vmem:[%s6 + $0x20c] sm:$0xf]
    %v353 = vld [vmem:[%s6 + $0x210] sm:$0xf]
    %v354 = vld [vmem:[%s6 + $0x214] sm:$0xf]
    %v355 = vld [vmem:[%s6 + $0x218] sm:$0xf]
    %v356 = vld [vmem:[%s6 + $0x21c] sm:$0xf]
    %v357 = vld [vmem:[%s6 + $0x220] sm:$0xf]
    %v358 = vld [vmem:[%s6 + $0x224] sm:$0xf]
    %v359 = vld [vmem:[%s6 + $0x228] sm:$0xf]
    %v360 = vld [vmem:[%s6 + $0x22c] sm:$0xf]
    %v361 = vld [vmem:[%s6 + $0x230] sm:$0xf]
    %v362 = vld [vmem:[%s6 + $0x234] sm:$0xf]
    %v363 = vld [vmem:[%s6 + $0x238] sm:$0xf]
    %v364 = vld [vmem:[%s6 + $0x23c] sm:$0xf]
    %v365 = vld [vmem:[%s6 + $0x240] sm:$0xf]
    %v366 = vld [vmem:[%s6 + $0x244] sm:$0xf]
    %v367 = vld [vmem:[%s6 + $0x248] sm:$0xf]
    %v368 = vld [vmem:[%s6 + $0x24c] sm:$0xf]
    %v369 = vld [vmem:[%s6 + $0x250] sm:$0xf]
    %v370 = vld [vmem:[%s6 + $0x254] sm:$0xf]
    %v371 = vld [vmem:[%s6 + $0x258] sm:$0xf]
    %v372 = vld [vmem:[%s6 + $0x25c] sm:$0xf]
    %v373 = vld [vmem:[%s6 + $0x260] sm:$0xf]
    %v374 = vld [vmem:[%s6 + $0x264] sm:$0xf]
    %v375 = vld [vmem:[%s6 + $0x268] sm:$0xf]
    %v376 = vld [vmem:[%s6 + $0x26c] sm:$0xf]
    %v377 = vld [vmem:[%s6 + $0x270] sm:$0xf]
    %v378 = vld [vmem:[%s6 + $0x274] sm:$0xf]
    %v379 = vld [vmem:[%s6 + $0x278] sm:$0xf]
    %v380 = vld [vmem:[%s6 + $0x27c] sm:$0xf]
    %v381 = vld [vmem:[%s6 + $0x280] sm:$0xf]
    %v382 = vld [vmem:[%s6 + $0x284] sm:$0xf]
    %v383 = vld [vmem:[%s6 + $0x288] sm:$0xf]
    %v384 = vld [vmem:[%s6 + $0x28c] sm:$0xf]
    %v385 = vld [vmem:[%s6 + $0x290] sm:$0xf]
    %v386 = vld [vmem:[%s6 + $0x294] sm:$0xf]
    %v387 = vld [vmem:[%s6 + $0x298] sm:$0xf]
    %v388 = vld [vmem:[%s6 + $0x29c] sm:$0xf]
    %v389 = vld [vmem:[%s6 + $0x2a0] sm:$0xf]
    %v390 = vld [vmem:[%s6 + $0x2a4] sm:$0xf]
    %v391 = vld [vmem:[%s6 + $0x2a8] sm:$0xf]
    %v392 = vld [vmem:[%s6 + $0x2ac] sm:$0xf]
    %v393 = vld [vmem:[%s6 + $0x2b0] sm:$0xf]
    %v394 = vld [vmem:[%s6 + $0x2b4] sm:$0xf]
    %v395 = vld [vmem:[%s6 + $0x2b8] sm:$0xf]
    %v396 = vld [vmem:[%s6 + $0x2bc] sm:$0xf]
    %v397 = vld [vmem:[%s6 + $0x2c0] sm:$0xf]
    %v398 = vld [vmem:[%s6 + $0x2c4] sm:$0xf]
    %v399 = vld [vmem:[%s6 + $0x2c8] sm:$0xf]
    %v400 = vld [vmem:[%s6 + $0x2cc] sm:$0xf]
    %v401 = vld [vmem:[%s6 + $0x2d0] sm:$0xf]
    %v402 = vld [vmem:[%s6 + $0x2d4] sm:$0xf]
    %v403 = vld [vmem:[%s6 + $0x2d8] sm:$0xf]
    %v404 = vld [vmem:[%s6 + $0x2dc] sm:$0xf]
    %v405 = vld [vmem:[%s6 + $0x2e0] sm:$0xf]
    %v406 = vld [vmem:[%s6 + $0x2e4] sm:$0xf]
    %v407 = vld [vmem:[%s6 + $0x2e8] sm:$0xf]
    %v408 = vld [vmem:[%s6 + $0x2ec] sm:$0xf]
    %v409 = vld [vmem:[%s6 + $0x2f0] sm:$0xf]
    %v410 = vld [vmem:[%s6 + $0x2f4] sm:$0xf]
    %v411 = vld [vmem:[%s6 + $0x2f8] sm:$0xf]
    %v412 = vld [vmem:[%s6 + $0x2fc] sm:$0xf]
    %v413 = vld [vmem:[%s6 + $0x300] sm:$0xf]
    %v414 = vld [vmem:[%s6 + $0x304] sm:$0xf]
    %v415 = vld [vmem:[%s6 + $0x308] sm:$0xf]
    %v416 = vld [vmem:[%s6 + $0x30c] sm:$0xf]
    %v417 = vld [vmem:[%s6 + $0x310] sm:$0xf]
    %v418 = vld [vmem:[%s6 + $0x314] sm:$0xf]
    %v419 = vld [vmem:[%s6 + $0x318] sm:$0xf]
    %v420 = vld [vmem:[%s6 + $0x31c] sm:$0xf]
    %v421 = vld [vmem:[%s6 + $0x320] sm:$0xf]
    %v422 = vld [vmem:[%s6 + $0x324] sm:$0xf]
    %v423 = vld [vmem:[%s6 + $0x328] sm:$0xf]
    %v424 = vld [vmem:[%s6 + $0x32c] sm:$0xf]
    %v425 = vld [vmem:[%s6 + $0x330] sm:$0xf]
    %v426 = vld [vmem:[%s6 + $0x334] sm:$0xf]
    %v427 = vld [vmem:[%s6 + $0x338] sm:$0xf]
    %v428 = vld [vmem:[%s6 + $0x33c] sm:$0xf]
    %v429 = vld [vmem:[%s6 + $0x340] sm:$0xf]
    %v430 = vld [vmem:[%s6 + $0x344] sm:$0xf]
    %v431 = vld [vmem:[%s6 + $0x348] sm:$0xf]
    %v432 = vld [vmem:[%s6 + $0x34c] sm:$0xf]
    %v433 = vld [vmem:[%s6 + $0x350] sm:$0xf]
    %v434 = vld [vmem:[%s6 + $0x354] sm:$0xf]
    %v435 = vld [vmem:[%s6 + $0x358] sm:$0xf]
    %v436 = vld [vmem:[%s6 + $0x35c] sm:$0xf]
    %v437 = vld [vmem:[%s6 + $0x360] sm:$0xf]
    %v438 = vld [vmem:[%s6 + $0x364] sm:$0xf]
    %v439 = vld [vmem:[%s6 + $0x368] sm:$0xf]
    %v440 = vld [vmem:[%s6 + $0x36c] sm:$0xf]
    %v441 = vld [vmem:[%s6 + $0x370] sm:$0xf]
    %v442 = vld [vmem:[%s6 + $0x374] sm:$0xf]
    %v443 = vld [vmem:[%s6 + $0x378] sm:$0xf]
    %v444 = vld [vmem:[%s6 + $0x37c] sm:$0xf]
    %v445 = vld [vmem:[%s6 + $0x380] sm:$0xf]
    %v446 = vld [vmem:[%s6 + $0x384] sm:$0xf]
    %v447 = vld [vmem:[%s6 + $0x388] sm:$0xf]
    %v448 = vld [vmem:[%s6 + $0x38c] sm:$0xf]
    %v449 = vld [vmem:[%s6 + $0x390] sm:$0xf]
    %v450 = vld [vmem:[%s6 + $0x394] sm:$0xf]
    %v451 = vld [vmem:[%s6 + $0x398] sm:$0xf]
    %v452 = vld [vmem:[%s6 + $0x39c] sm:$0xf]
    %v453 = vld [vmem:[%s6 + $0x3a0] sm:$0xf]
    %v454 = vld [vmem:[%s6 + $0x3a4] sm:$0xf]
    %v455 = vld [vmem:[%s6 + $0x3a8] sm:$0xf]
    %v456 = vld [vmem:[%s6 + $0x3ac] sm:$0xf]
    %v457 = vld [vmem:[%s6 + $0x3b0] sm:$0xf]
    %v458 = vld [vmem:[%s6 + $0x3b4] sm:$0xf]
    %v459 = vld [vmem:[%s6 + $0x3b8] sm:$0xf]
    %v460 = vld [vmem:[%s6 + $0x3bc] sm:$0xf]
    %v461 = vld [vmem:[%s6 + $0x3c0] sm:$0xf]
    %v462 = vld [vmem:[%s6 + $0x3c4] sm:$0xf]
    %v463 = vld [vmem:[%s6 + $0x3c8] sm:$0xf]
    %v464 = vld [vmem:[%s6 + $0x3cc] sm:$0xf]
    %v465 = vld [vmem:[%s6 + $0x3d0] sm:$0xf]
    %v466 = vld [vmem:[%s6 + $0x3d4] sm:$0xf]
    %v467 = vld [vmem:[%s6 + $0x3d8] sm:$0xf]
    %v468 = vld [vmem:[%s6 + $0x3dc] sm:$0xf]
    %v469 = vld [vmem:[%s6 + $0x3e0] sm:$0xf]
    %v470 = vld [vmem:[%s6 + $0x3e4] sm:$0xf]
    %v471 = vld [vmem:[%s6 + $0x3e8] sm:$0xf]
    %v472 = vld [vmem:[%s6 + $0x3ec] sm:$0xf]
    %v473 = vld [vmem:[%s6 + $0x3f0] sm:$0xf]
    %v474 = vld [vmem:[%s6 + $0x3f4] sm:$0xf]
    %v475 = vld [vmem:[%s6 + $0x3f8] sm:$0xf]
    %v476 = vld [vmem:[%s6 + $0x3fc] sm:$0xf]
    %v477 = vunpack.c.l.bf16 %v221
    %v478 = vunpack.c.l.bf16 %v222
    %v479 = vunpack.c.l.bf16 %v223
    %v480 = vunpack.c.l.bf16 %v224
    %v481 = vunpack.c.l.bf16 %v225
    %v482 = vunpack.c.l.bf16 %v226
    %v483 = vunpack.c.l.bf16 %v227
    %v484 = vunpack.c.l.bf16 %v228
    %v485 = vunpack.c.l.bf16 %v229
    %v486 = vunpack.c.l.bf16 %v230
    %v487 = vunpack.c.l.bf16 %v231
    %v488 = vunpack.c.l.bf16 %v232
    %v489 = vunpack.c.l.bf16 %v233
    %v490 = vunpack.c.l.bf16 %v234
    %v491 = vunpack.c.l.bf16 %v235
    %v492 = vunpack.c.l.bf16 %v236
    %v493 = vunpack.c.l.bf16 %v237
    %v494 = vunpack.c.l.bf16 %v238
    %v495 = vunpack.c.l.bf16 %v239
    %v496 = vunpack.c.l.bf16 %v240
    %v497 = vunpack.c.l.bf16 %v241
    %v498 = vunpack.c.l.bf16 %v242
    %v499 = vunpack.c.l.bf16 %v243
    %v500 = vunpack.c.l.bf16 %v244
    %v501 = vunpack.c.l.bf16 %v245
    %v502 = vunpack.c.l.bf16 %v246
    %v503 = vunpack.c.l.bf16 %v247
    %v504 = vunpack.c.l.bf16 %v248
    %v505 = vunpack.c.l.bf16 %v249
    %v506 = vunpack.c.l.bf16 %v250
    %v507 = vunpack.c.l.bf16 %v251
    %v508 = vunpack.c.l.bf16 %v252
    %v509 = vunpack.c.l.bf16 %v253
    %v510 = vunpack.c.l.bf16 %v254
    %v511 = vunpack.c.l.bf16 %v255
    %v512 = vunpack.c.l.bf16 %v256
    %v513 = vunpack.c.l.bf16 %v257
    %v514 = vunpack.c.l.bf16 %v258
    %v515 = vunpack.c.l.bf16 %v259
    %v516 = vunpack.c.l.bf16 %v260
    %v517 = vunpack.c.l.bf16 %v261
    %v518 = vunpack.c.l.bf16 %v262
    %v519 = vunpack.c.l.bf16 %v263
    %v520 = vunpack.c.l.bf16 %v264
    %v521 = vunpack.c.l.bf16 %v265
    %v522 = vunpack.c.l.bf16 %v266
    %v523 = vunpack.c.l.bf16 %v267
    %v524 = vunpack.c.l.bf16 %v268
    %v525 = vunpack.c.l.bf16 %v269
    %v526 = vunpack.c.l.bf16 %v270
    %v527 = vunpack.c.l.bf16 %v271
    %v528 = vunpack.c.l.bf16 %v272
    %v529 = vunpack.c.l.bf16 %v273
    %v530 = vunpack.c.l.bf16 %v274
    %v531 = vunpack.c.l.bf16 %v275
    %v532 = vunpack.c.l.bf16 %v276
    %v533 = vunpack.c.l.bf16 %v277
    %v534 = vunpack.c.l.bf16 %v278
    %v535 = vunpack.c.l.bf16 %v279
    %v536 = vunpack.c.l.bf16 %v280
    %v537 = vunpack.c.l.bf16 %v281
    %v538 = vunpack.c.l.bf16 %v282
    %v539 = vunpack.c.l.bf16 %v283
    %v540 = vunpack.c.l.bf16 %v284
    %v541 = vunpack.c.l.bf16 %v285
    %v542 = vunpack.c.l.bf16 %v286
    %v543 = vunpack.c.l.bf16 %v287
    %v544 = vunpack.c.l.bf16 %v288
    %v545 = vunpack.c.l.bf16 %v289
    %v546 = vunpack.c.l.bf16 %v290
    %v547 = vunpack.c.l.bf16 %v291
    %v548 = vunpack.c.l.bf16 %v292
    %v549 = vunpack.c.l.bf16 %v293
    %v550 = vunpack.c.l.bf16 %v294
    %v551 = vunpack.c.l.bf16 %v295
    %v552 = vunpack.c.l.bf16 %v296
    %v553 = vunpack.c.l.bf16 %v297
    %v554 = vunpack.c.l.bf16 %v298
    %v555 = vunpack.c.l.bf16 %v299
    %v556 = vunpack.c.l.bf16 %v300
    %v557 = vunpack.c.l.bf16 %v301
    %v558 = vunpack.c.l.bf16 %v302
    %v559 = vunpack.c.l.bf16 %v303
    %v560 = vunpack.c.l.bf16 %v304
    %v561 = vunpack.c.l.bf16 %v305
    %v562 = vunpack.c.l.bf16 %v306
    %v563 = vunpack.c.l.bf16 %v307
    %v564 = vunpack.c.l.bf16 %v308
    %v565 = vunpack.c.l.bf16 %v309
    %v566 = vunpack.c.l.bf16 %v310
    %v567 = vunpack.c.l.bf16 %v311
    %v568 = vunpack.c.l.bf16 %v312
    %v569 = vunpack.c.l.bf16 %v313
    %v570 = vunpack.c.l.bf16 %v314
    %v571 = vunpack.c.l.bf16 %v315
    %v572 = vunpack.c.l.bf16 %v316
    %v573 = vunpack.c.l.bf16 %v317
    %v574 = vunpack.c.l.bf16 %v318
    %v575 = vunpack.c.l.bf16 %v319
    %v576 = vunpack.c.l.bf16 %v320
    %v577 = vunpack.c.l.bf16 %v321
    %v578 = vunpack.c.l.bf16 %v322
    %v579 = vunpack.c.l.bf16 %v323
    %v580 = vunpack.c.l.bf16 %v324
    %v581 = vunpack.c.l.bf16 %v325
    %v582 = vunpack.c.l.bf16 %v326
    %v583 = vunpack.c.l.bf16 %v327
    %v584 = vunpack.c.l.bf16 %v328
    %v585 = vunpack.c.l.bf16 %v329
    %v586 = vunpack.c.l.bf16 %v330
    %v587 = vunpack.c.l.bf16 %v331
    %v588 = vunpack.c.l.bf16 %v332
    %v589 = vunpack.c.l.bf16 %v333
    %v590 = vunpack.c.l.bf16 %v334
    %v591 = vunpack.c.l.bf16 %v335
    %v592 = vunpack.c.l.bf16 %v336
    %v593 = vunpack.c.l.bf16 %v337
    %v594 = vunpack.c.l.bf16 %v338
    %v595 = vunpack.c.l.bf16 %v339
    %v596 = vunpack.c.l.bf16 %v340
    %v597 = vunpack.c.l.bf16 %v341
    %v598 = vunpack.c.l.bf16 %v342
    %v599 = vunpack.c.l.bf16 %v343
    %v600 = vunpack.c.l.bf16 %v344
    %v601 = vunpack.c.l.bf16 %v345
    %v602 = vunpack.c.l.bf16 %v346
    %v603 = vunpack.c.l.bf16 %v347
    %v604 = vunpack.c.l.bf16 %v348
    %v605 = vunpack.c.l.bf16 %v349
    %v606 = vunpack.c.l.bf16 %v350
    %v607 = vunpack.c.l.bf16 %v351
    %v608 = vunpack.c.l.bf16 %v352
    %v609 = vunpack.c.l.bf16 %v353
    %v610 = vunpack.c.l.bf16 %v354
    %v611 = vunpack.c.l.bf16 %v355
    %v612 = vunpack.c.l.bf16 %v356
    %v613 = vunpack.c.l.bf16 %v357
    %v614 = vunpack.c.l.bf16 %v358
    %v615 = vunpack.c.l.bf16 %v359
    %v616 = vunpack.c.l.bf16 %v360
    %v617 = vunpack.c.l.bf16 %v361
    %v618 = vunpack.c.l.bf16 %v362
    %v619 = vunpack.c.l.bf16 %v363
    %v620 = vunpack.c.l.bf16 %v364
    %v621 = vunpack.c.l.bf16 %v365
    %v622 = vunpack.c.l.bf16 %v366
    %v623 = vunpack.c.l.bf16 %v367
    %v624 = vunpack.c.l.bf16 %v368
    %v625 = vunpack.c.l.bf16 %v369
    %v626 = vunpack.c.l.bf16 %v370
    %v627 = vunpack.c.l.bf16 %v371
    %v628 = vunpack.c.l.bf16 %v372
    %v629 = vunpack.c.l.bf16 %v373
    %v630 = vunpack.c.l.bf16 %v374
    %v631 = vunpack.c.l.bf16 %v375
    %v632 = vunpack.c.l.bf16 %v376
    %v633 = vunpack.c.l.bf16 %v377
    %v634 = vunpack.c.l.bf16 %v378
    %v635 = vunpack.c.l.bf16 %v379
    %v636 = vunpack.c.l.bf16 %v380
    %v637 = vunpack.c.l.bf16 %v381
    %v638 = vunpack.c.l.bf16 %v382
    %v639 = vunpack.c.l.bf16 %v383
    %v640 = vunpack.c.l.bf16 %v384
    %v641 = vunpack.c.l.bf16 %v385
    %v642 = vunpack.c.l.bf16 %v386
    %v643 = vunpack.c.l.bf16 %v387
    %v644 = vunpack.c.l.bf16 %v388
    %v645 = vunpack.c.l.bf16 %v389
    %v646 = vunpack.c.l.bf16 %v390
    %v647 = vunpack.c.l.bf16 %v391
    %v648 = vunpack.c.l.bf16 %v392
    %v649 = vunpack.c.l.bf16 %v393
    %v650 = vunpack.c.l.bf16 %v394
    %v651 = vunpack.c.l.bf16 %v395
    %v652 = vunpack.c.l.bf16 %v396
    %v653 = vunpack.c.l.bf16 %v397
    %v654 = vunpack.c.l.bf16 %v398
    %v655 = vunpack.c.l.bf16 %v399
    %v656 = vunpack.c.l.bf16 %v400
    %v657 = vunpack.c.l.bf16 %v401
    %v658 = vunpack.c.l.bf16 %v402
    %v659 = vunpack.c.l.bf16 %v403
    %v660 = vunpack.c.l.bf16 %v404
    %v661 = vunpack.c.l.bf16 %v405
    %v662 = vunpack.c.l.bf16 %v406
    %v663 = vunpack.c.l.bf16 %v407
    %v664 = vunpack.c.l.bf16 %v408
    %v665 = vunpack.c.l.bf16 %v409
    %v666 = vunpack.c.l.bf16 %v410
    %v667 = vunpack.c.l.bf16 %v411
    %v668 = vunpack.c.l.bf16 %v412
    %v669 = vunpack.c.l.bf16 %v413
    %v670 = vunpack.c.l.bf16 %v414
    %v671 = vunpack.c.l.bf16 %v415
    %v672 = vunpack.c.l.bf16 %v416
    %v673 = vunpack.c.l.bf16 %v417
    %v674 = vunpack.c.l.bf16 %v418
    %v675 = vunpack.c.l.bf16 %v419
    %v676 = vunpack.c.l.bf16 %v420
    %v677 = vunpack.c.l.bf16 %v421
    %v678 = vunpack.c.l.bf16 %v422
    %v679 = vunpack.c.l.bf16 %v423
    %v680 = vunpack.c.l.bf16 %v424
    %v681 = vunpack.c.l.bf16 %v425
    %v682 = vunpack.c.l.bf16 %v426
    %v683 = vunpack.c.l.bf16 %v427
    %v684 = vunpack.c.l.bf16 %v428
    %v685 = vunpack.c.l.bf16 %v429
    %v686 = vunpack.c.l.bf16 %v430
    %v687 = vunpack.c.l.bf16 %v431
    %v688 = vunpack.c.l.bf16 %v432
    %v689 = vunpack.c.l.bf16 %v433
    %v690 = vunpack.c.l.bf16 %v434
    %v691 = vunpack.c.l.bf16 %v435
    %v692 = vunpack.c.l.bf16 %v436
    %v693 = vunpack.c.l.bf16 %v437
    %v694 = vunpack.c.l.bf16 %v438
    %v695 = vunpack.c.l.bf16 %v439
    %v696 = vunpack.c.l.bf16 %v440
    %v697 = vunpack.c.l.bf16 %v441
    %v698 = vunpack.c.l.bf16 %v442
    %v699 = vunpack.c.l.bf16 %v443
    %v700 = vunpack.c.l.bf16 %v444
    %v701 = vunpack.c.l.bf16 %v445
    %v702 = vunpack.c.l.bf16 %v446
    %v703 = vunpack.c.l.bf16 %v447
    %v704 = vunpack.c.l.bf16 %v448
    %v705 = vunpack.c.l.bf16 %v449
    %v706 = vunpack.c.l.bf16 %v450
    %v707 = vunpack.c.l.bf16 %v451
    %v708 = vunpack.c.l.bf16 %v452
    %v709 = vunpack.c.l.bf16 %v453
    %v710 = vunpack.c.l.bf16 %v454
    %v711 = vunpack.c.l.bf16 %v455
    %v712 = vunpack.c.l.bf16 %v456
    %v713 = vunpack.c.l.bf16 %v457
    %v714 = vunpack.c.l.bf16 %v458
    %v715 = vunpack.c.l.bf16 %v459
    %v716 = vunpack.c.l.bf16 %v460
    %v717 = vunpack.c.l.bf16 %v461
    %v718 = vunpack.c.l.bf16 %v462
    %v719 = vunpack.c.l.bf16 %v463
    %v720 = vunpack.c.l.bf16 %v464
    %v721 = vunpack.c.l.bf16 %v465
    %v722 = vunpack.c.l.bf16 %v466
    %v723 = vunpack.c.l.bf16 %v467
    %v724 = vunpack.c.l.bf16 %v468
    %v725 = vunpack.c.l.bf16 %v469
    %v726 = vunpack.c.l.bf16 %v470
    %v727 = vunpack.c.l.bf16 %v471
    %v728 = vunpack.c.l.bf16 %v472
    %v729 = vunpack.c.l.bf16 %v473
    %v730 = vunpack.c.l.bf16 %v474
    %v731 = vunpack.c.l.bf16 %v475
    %v732 = vunpack.c.l.bf16 %v476
    %v733 = vld [vmem:[%s7] sm:$0xf]
    %v734 = vld [vmem:[%s7 + $0x4] sm:$0xf]
    %v735 = vld [vmem:[%s7 + $0x8] sm:$0xf]
    %v736 = vld [vmem:[%s7 + $0xc] sm:$0xf]
    %v737 = vld [vmem:[%s7 + $0x10] sm:$0x3]
    %v738 = vunpack.c.l.bf16 %v733
    %v739 = vunpack.c.l.bf16 %v734
    %v740 = vunpack.c.l.bf16 %v735
    %v741 = vunpack.c.l.bf16 %v736
    %v742 = vunpack.c.l.bf16 %v737
    %v743 = vld [vmem:[%s0] sm:$0xff]
    %v744 = vld [vmem:[%s0 + $0x8] sm:$0xff]
    %v745 = vld [vmem:[%s8] sm:$0x1]
    %v746 = vlaneseq
    %v747 = vshrl.u32 %v746, 7
    %v748 = vsub.s32 0, %v747
    %v749 = vrot.slane %v745, %v748
    %vm750 = vcmask 179200
    %v752 = vsel %vm750, %v743, 0
    %v755 = vsel %vm750, %v744, 0
    %vm757 = vcmask 1045504
    %v759 = vsel %vm757, %v43, 0
    %761 = vmatprep.subr.mxu0 0.0
    %762 = vmatpush1.msra.mxu0 0.0
    %763 = vmatprep.subr.mxu0 0.0
    %764 = vmatpush1.msra.mxu0 0.0
    %765 = vmatprep.subr.mxu0 0.0
    %766 = vmatpush1.msra.mxu0 0.0
    %767 = vmatprep.subr.mxu0 0.0
    %768 = vmatpush1.msra.mxu0 0.0
    %769 = vmatprep.subr.mxu0 0.0
    %770 = vmatpush1.msra.mxu0 0.0
    %771 = vmatprep.subr.mxu0 0.0
    %772 = vmatpush1.msra.mxu0 0.0
    %773 = vmatprep.subr.mxu0 0.0
    %774 = vmatpush1.msra.mxu0 0.0
    %775 = vmatprep.subr.mxu0 0.0
    %776 = vmatpush1.msra.mxu0 0.0
    %777 = vmatprep.subr.mxu0 0.0
    %778 = vmatpush1.msra.mxu0 0.0
    %779 = vmatprep.subr.mxu0 0.0
    %780 = vmatpush1.msra.mxu0 0.0
    %781 = vmatprep.subr.mxu0 0.0
    %782 = vmatpush1.msra.mxu0 0.0
    %783 = vmatprep.subr.mxu0 0.0
    %784 = vmatpush1.msra.mxu0 0.0
    %785 = vmatprep.subr.mxu0 0.0
    %786 = vmatpush1.msra.mxu0 0.0
    %787 = vmatprep.subr.mxu0 0.0
    %788 = vmatpush1.msra.mxu0 %v759
    %789 = vmatprep.subr.mxu0 0.0
    %790 = vmatpush1.msra.mxu0 %v42
    %791 = vmatprep.subr.mxu0 0.0
    %792 = vmatpush1.msra.mxu0 %v41
    %793 = vmatprep.subr.mxu0 0.0
    %794 = vmatpush2.msra.mxu0 0.0
    %795 = vmatprep.subr.mxu0 0.0
    %796 = vmatpush2.msra.mxu0 0.0
    %797 = vmatprep.subr.mxu0 0.0
    %798 = vmatpush2.msra.mxu0 0.0
    %799 = vmatprep.subr.mxu0 0.0
    %800 = vmatpush2.msra.mxu0 0.0
    %801 = vmatprep.subr.mxu0 0.0
    %802 = vmatpush2.msra.mxu0 0.0
    %803 = vmatprep.subr.mxu0 0.0
    %804 = vmatpush2.msra.mxu0 0.0
    %805 = vmatprep.subr.mxu0 0.0
    %806 = vmatpush2.msra.mxu0 0.0
    %807 = vmatprep.subr.mxu0 0.0
    %808 = vmatpush2.msra.mxu0 0.0
    %809 = vmatprep.subr.mxu0 0.0
    %810 = vmatpush2.msra.mxu0 0.0
    %811 = vmatprep.subr.mxu0 0.0
    %812 = vmatpush2.msra.mxu0 0.0
    %813 = vmatprep.subr.mxu0 0.0
    %814 = vmatpush2.msra.mxu0 0.0
    %815 = vmatprep.subr.mxu0 0.0
    %816 = vmatpush2.msra.mxu0 0.0
    %817 = vmatprep.subr.mxu0 0.0
    %818 = vmatpush2.msra.mxu0 0.0
    %819 = vmatprep.subr.mxu0 0.0
    %820 = vmatpush2.msra.mxu0 0.0
    %821 = vmatprep.subr.mxu0 0.0
    %822 = vmatpush2.msra.mxu0 0.0
    %823 = vmatprep.subr.mxu0 0.0
    %824 = vmatpush2.msra.mxu0 0.0
    %825 = vmatprep.mubr.f32.mxu0 0.0
    %826 = vmatmul.mubr.f32.gmra.mxu0 %v752
    %v827 = vpop.f32.mrf.mxu0
    %v828 = vadd.f32 %v749, %v827
    %v829 = vpop.f32.mrf.mxu0
    %830 = vmatprep.mubr.f32.mxu0 0.0
    %831 = vmatmul.mubr.f32.gmra.mxu0 %v755
    %v832 = vpop.f32.mrf.mxu0
    %v833 = vadd.f32 %v749, %v832
    %v834 = vpop.f32.mrf.mxu0
    %835 = vdwg.mxu0
    %vm836 = vcmask 293888
    %v838 = vsel %vm836, %v828, 0
    %v841 = vsel %vm836, %v833, 0
    %vm843 = vcmask 1043456
    %v845 = vsel %vm843, %v66, 0
    %v848 = vsel %vm843, %v67, 0
    %v851 = vsel %vm843, %v68, 0
    %853 = vmatprep.subr.mxu0 0.0
    %854 = vmatpush1.msra.mxu0 0.0
    %855 = vmatprep.subr.mxu0 0.0
    %856 = vmatpush1.msra.mxu0 0.0
    %857 = vmatprep.subr.mxu0 0.0
    %858 = vmatpush1.msra.mxu0 0.0
    %859 = vmatprep.subr.mxu0 0.0
    %860 = vmatpush1.msra.mxu0 0.0
    %861 = vmatprep.subr.mxu0 0.0
    %862 = vmatpush1.msra.mxu0 0.0
    %863 = vmatprep.subr.mxu0 0.0
    %864 = vmatpush1.msra.mxu0 0.0
    %865 = vmatprep.subr.mxu0 0.0
    %866 = vmatpush1.msra.mxu0 0.0
    %867 = vmatprep.subr.mxu0 0.0
    %868 = vmatpush1.msra.mxu0 0.0
    %869 = vmatprep.subr.mxu0 0.0
    %870 = vmatpush1.msra.mxu0 0.0
    %871 = vmatprep.subr.mxu0 0.0
    %872 = vmatpush1.msra.mxu0 0.0
    %873 = vmatprep.subr.mxu0 0.0
    %874 = vmatpush1.msra.mxu0 0.0
    %875 = vmatprep.subr.mxu0 %v848
    %876 = vmatpush1.msra.mxu0 %v845
    %877 = vmatprep.subr.mxu0 %v64
    %878 = vmatpush1.msra.mxu0 %v63
    %879 = vmatprep.subr.mxu0 %v61
    %880 = vmatpush1.msra.mxu0 %v60
    %881 = vmatprep.subr.mxu0 %v58
    %882 = vmatpush1.msra.mxu0 %v57
    %883 = vmatprep.subr.mxu0 %v55
    %884 = vmatpush1.msra.mxu0 %v54
    %885 = vmatprep.subr.mxu0 0.0
    %886 = vmatpush2.msra.mxu0 0.0
    %887 = vmatprep.subr.mxu0 0.0
    %888 = vmatpush2.msra.mxu0 0.0
    %889 = vmatprep.subr.mxu0 0.0
    %890 = vmatpush2.msra.mxu0 0.0
    %891 = vmatprep.subr.mxu0 0.0
    %892 = vmatpush2.msra.mxu0 0.0
    %893 = vmatprep.subr.mxu0 0.0
    %894 = vmatpush2.msra.mxu0 0.0
    %895 = vmatprep.subr.mxu0 0.0
    %896 = vmatpush2.msra.mxu0 0.0
    %897 = vmatprep.subr.mxu0 0.0
    %898 = vmatpush2.msra.mxu0 0.0
    %899 = vmatprep.subr.mxu0 0.0
    %900 = vmatpush2.msra.mxu0 0.0
    %901 = vmatprep.subr.mxu0 0.0
    %902 = vmatpush2.msra.mxu0 0.0
    %903 = vmatprep.subr.mxu0 0.0
    %904 = vmatpush2.msra.mxu0 0.0
    %905 = vmatprep.subr.mxu0 0.0
    %906 = vmatpush2.msra.mxu0 0.0
    %907 = vmatprep.subr.mxu0 0.0
    %908 = vmatpush2.msra.mxu0 0.0
    %909 = vmatprep.subr.mxu0 0.0
    %910 = vmatpush2.msra.mxu0 0.0
    %911 = vmatprep.subr.mxu0 0.0
    %912 = vmatpush2.msra.mxu0 0.0
    %913 = vmatprep.subr.mxu0 0.0
    %914 = vmatpush2.msra.mxu0 0.0
    %915 = vmatprep.subr.mxu0 0.0
    %916 = vmatpush2.msra.mxu0 0.0
    %917 = vmatprep.mubr.f32.mxu0 0.0
    %918 = vmatmul.mubr.f32.gmra.mxu0 %v838
    %v919 = vpop.f32.mrf.mxu0
    %v920 = vadd.f32 0.0, %v919
    %v921 = vpop.f32.mrf.mxu0
    %v922 = vadd.f32 0.0, %v921
    %923 = vmatprep.mubr.f32.mxu0 0.0
    %924 = vmatmul.mubr.f32.gmra.mxu0 %v841
    %v925 = vpop.f32.mrf.mxu0
    %v926 = vadd.f32 0.0, %v925
    %v927 = vpop.f32.mrf.mxu0
    %v928 = vadd.f32 0.0, %v927
    %929 = vdwg.mxu0
    %930 = vmatprep.subr.mxu0 0.0
    %931 = vmatpush1.msra.mxu0 0.0
    %932 = vmatprep.subr.mxu0 0.0
    %933 = vmatpush1.msra.mxu0 0.0
    %934 = vmatprep.subr.mxu0 0.0
    %935 = vmatpush1.msra.mxu0 0.0
    %936 = vmatprep.subr.mxu0 0.0
    %937 = vmatpush1.msra.mxu0 0.0
    %938 = vmatprep.subr.mxu0 0.0
    %939 = vmatpush1.msra.mxu0 0.0
    %940 = vmatprep.subr.mxu0 0.0
    %941 = vmatpush1.msra.mxu0 0.0
    %942 = vmatprep.subr.mxu0 0.0
    %943 = vmatpush1.msra.mxu0 0.0
    %944 = vmatprep.subr.mxu0 0.0
    %945 = vmatpush1.msra.mxu0 0.0
    %946 = vmatprep.subr.mxu0 0.0
    %947 = vmatpush1.msra.mxu0 0.0
    %948 = vmatprep.subr.mxu0 0.0
    %949 = vmatpush1.msra.mxu0 0.0
    %950 = vmatprep.subr.mxu0 0.0
    %951 = vmatpush1.msra.mxu0 0.0
    %952 = vmatprep.subr.mxu0 0.0
    %953 = vmatpush1.msra.mxu0 %v851
    %954 = vmatprep.subr.mxu0 0.0
    %955 = vmatpush1.msra.mxu0 %v65
    %956 = vmatprep.subr.mxu0 0.0
    %957 = vmatpush1.msra.mxu0 %v62
    %958 = vmatprep.subr.mxu0 0.0
    %959 = vmatpush1.msra.mxu0 %v59
    %960 = vmatprep.subr.mxu0 0.0
    %961 = vmatpush1.msra.mxu0 %v56
    %962 = vmatprep.subr.mxu0 0.0
    %963 = vmatpush2.msra.mxu0 0.0
    %964 = vmatprep.subr.mxu0 0.0
    %965 = vmatpush2.msra.mxu0 0.0
    %966 = vmatprep.subr.mxu0 0.0
    %967 = vmatpush2.msra.mxu0 0.0
    %968 = vmatprep.subr.mxu0 0.0
    %969 = vmatpush2.msra.mxu0 0.0
    %970 = vmatprep.subr.mxu0 0.0
    %971 = vmatpush2.msra.mxu0 0.0
    %972 = vmatprep.subr.mxu0 0.0
    %973 = vmatpush2.msra.mxu0 0.0
    %974 = vmatprep.subr.mxu0 0.0
    %975 = vmatpush2.msra.mxu0 0.0
    %976 = vmatprep.subr.mxu0 0.0
    %977 = vmatpush2.msra.mxu0 0.0
    %978 = vmatprep.subr.mxu0 0.0
    %979 = vmatpush2.msra.mxu0 0.0
    %980 = vmatprep.subr.mxu0 0.0
    %981 = vmatpush2.msra.mxu0 0.0
    %982 = vmatprep.subr.mxu0 0.0
    %983 = vmatpush2.msra.mxu0 0.0
    %984 = vmatprep.subr.mxu0 0.0
    %985 = vmatpush2.msra.mxu0 0.0
    %986 = vmatprep.subr.mxu0 0.0
    %987 = vmatpush2.msra.mxu0 0.0
    %988 = vmatprep.subr.mxu0 0.0
    %989 = vmatpush2.msra.mxu0 0.0
    %990 = vmatprep.subr.mxu0 0.0
    %991 = vmatpush2.msra.mxu0 0.0
    %992 = vmatprep.subr.mxu0 0.0
    %993 = vmatpush2.msra.mxu0 0.0
    %994 = vmatprep.mubr.f32.mxu0 0.0
    %995 = vmatmul.mubr.f32.gmra.mxu0 %v838
    %v996 = vpop.f32.mrf.mxu0
    %v997 = vadd.f32 0.0, %v996
    %v998 = vpop.f32.mrf.mxu0
    %999 = vmatprep.mubr.f32.mxu0 0.0
    %1000 = vmatmul.mubr.f32.gmra.mxu0 %v841
    %v1001 = vpop.f32.mrf.mxu0
    %v1002 = vadd.f32 0.0, %v1001
    %v1003 = vpop.f32.mrf.mxu0
    %1004 = vdwg.mxu0
    %v1005 = vld [vmem:[%s8 + $0x1] sm:$0x1]
    %v1006 = vlaneseq
    %v1007 = vshrl.u32 %v1006, 7
    %v1008 = vsub.s32 0, %v1007
    %v1009 = vrot.slane %v1005, %v1008
    %v1010 = vadd.f32 %v920, %v1009
    %v1011 = vadd.f32 %v926, %v1009
    %v1012 = vld [vmem:[%s8 + $0x2] sm:$0x1]
    %v1013 = vlaneseq
    %v1014 = vshrl.u32 %v1013, 7
    %v1015 = vsub.s32 0, %v1014
    %v1016 = vrot.slane %v1012, %v1015
    %v1017 = vadd.f32 %v922, %v1016
    %v1018 = vadd.f32 %v928, %v1016
    %v1019 = vld [vmem:[%s8 + $0x3] sm:$0x1]
    %v1020 = vlaneseq
    %v1021 = vshrl.u32 %v1020, 7
    %v1022 = vsub.s32 0, %v1021
    %v1023 = vrot.slane %v1019, %v1022
    %v1024 = vadd.f32 %v997, %v1023
    %v1025 = vadd.f32 %v1002, %v1023
    %1026 = vmatprep.subr.mxu0 0.0
    %1027 = vmatpush1.xpose.msra.mxu0 0.0
    %1028 = vmatprep.subr.mxu0 0.0
    %1029 = vmatpush1.xpose.msra.mxu0 0.0
    %1030 = vmatprep.subr.mxu0 0.0
    %1031 = vmatpush1.xpose.msra.mxu0 0.0
    %1032 = vmatprep.subr.mxu0 0.0
    %1033 = vmatpush1.xpose.msra.mxu0 0.0
    %1034 = vmatprep.subr.mxu0 0.0
    %1035 = vmatpush1.xpose.msra.mxu0 0.0
    %1036 = vmatprep.subr.mxu0 0.0
    %1037 = vmatpush1.xpose.msra.mxu0 0.0
    %1038 = vmatprep.subr.mxu0 0.0
    %1039 = vmatpush1.xpose.msra.mxu0 0.0
    %1040 = vmatprep.subr.mxu0 0.0
    %1041 = vmatpush1.xpose.msra.mxu0 0.0
    %1042 = vmatprep.subr.mxu0 0.0
    %1043 = vmatpush1.xpose.msra.mxu0 0.0
    %1044 = vmatprep.subr.mxu0 0.0
    %1045 = vmatpush1.xpose.msra.mxu0 0.0
    %1046 = vmatprep.subr.mxu0 0.0
    %1047 = vmatpush1.xpose.msra.mxu0 0.0
    %1048 = vmatprep.subr.mxu0 0.0
    %1049 = vmatpush1.xpose.msra.mxu0 0.0
    %1050 = vmatprep.subr.mxu0 0.0
    %1051 = vmatpush1.xpose.msra.mxu0 0.0
    %1052 = vmatprep.subr.mxu0 0.0
    %1053 = vmatpush1.xpose.msra.mxu0 0.0
    %1054 = vmatprep.subr.mxu0 0.0
    %1055 = vmatpush1.xpose.msra.mxu0 %v1018
    %1056 = vmatprep.subr.mxu0 0.0
    %1057 = vmatpush1.xpose.msra.mxu0 %v1017
    %1058 = vmatprep.subr.mxu0 0.0
    %1059 = vmatpush2.xpose.msra.mxu0 0.0
    %1060 = vmatprep.subr.mxu0 0.0
    %1061 = vmatpush2.xpose.msra.mxu0 0.0
    %1062 = vmatprep.subr.mxu0 0.0
    %1063 = vmatpush2.xpose.msra.mxu0 0.0
    %1064 = vmatprep.subr.mxu0 0.0
    %1065 = vmatpush2.xpose.msra.mxu0 0.0
    %1066 = vmatprep.subr.mxu0 0.0
    %1067 = vmatpush2.xpose.msra.mxu0 0.0
    %1068 = vmatprep.subr.mxu0 0.0
    %1069 = vmatpush2.xpose.msra.mxu0 0.0
    %1070 = vmatprep.subr.mxu0 0.0
    %1071 = vmatpush2.xpose.msra.mxu0 0.0
    %1072 = vmatprep.subr.mxu0 0.0
    %1073 = vmatpush2.xpose.msra.mxu0 0.0
    %1074 = vmatprep.subr.mxu0 0.0
    %1075 = vmatpush2.xpose.msra.mxu0 0.0
    %1076 = vmatprep.subr.mxu0 0.0
    %1077 = vmatpush2.xpose.msra.mxu0 0.0
    %1078 = vmatprep.subr.mxu0 0.0
    %1079 = vmatpush2.xpose.msra.mxu0 0.0
    %1080 = vmatprep.subr.mxu0 0.0
    %1081 = vmatpush2.xpose.msra.mxu0 0.0
    %1082 = vmatprep.subr.mxu0 0.0
    %1083 = vmatpush2.xpose.msra.mxu0 0.0
    %1084 = vmatprep.subr.mxu0 0.0
    %1085 = vmatpush2.xpose.msra.mxu0 0.0
    %1086 = vmatprep.subr.mxu0 0.0
    %1087 = vmatpush2.xpose.msra.mxu0 0.0
    %1088 = vmatprep.subr.mxu0 0.0
    %1089 = vmatpush2.xpose.msra.mxu0 0.0
    %1090 = vmatprep.mubr.f32.mxu0 0.0
    %1091 = vmatmul.mubr.f32.gmra.mxu0 %v1010
    %v1092 = vpop.f32.mrf.mxu0
    %v1093 = vadd.f32 0.0, %v1092
    %v1094 = vpop.f32.mrf.mxu0
    %1095 = vmatprep.mubr.f32.mxu0 0.0
    %1096 = vmatmul.mubr.f32.gmra.mxu0 %v1011
    %v1097 = vpop.f32.mrf.mxu0
    %v1098 = vadd.f32 0.0, %v1097
    %v1099 = vpop.f32.mrf.mxu0
    %1100 = vdwg.mxu0
    %v1101 = vlaneseq
    %v1102 = vshrl.u32 %v1101, 7
    %v1103 = vadd.s32 %v1102, 8
    %v1104 = vlaneseq
    %v1105 = vand.u32 %v1104, 127
    %vm1106 = vcmp.le.s32.totalorder %v1105, %v1102
    %vm1107 = vcmp.le.s32.totalorder %v1105, %v1103
    %vm1108 = vcmp.ge.s32.totalorder %v1102, 0
    %vm1109 = vcmp.ge.s32.totalorder %v1103, 0
    %vm1110 = vcmp.lt.s32.totalorder %v1102, 8
    %vm1111 = vcmp.lt.s32.totalorder %v1103, 8
    %vm1112 = vmand %vm1108, %vm1110
    %vm1113 = vmand %vm1109, %vm1111
    %vm1114 = vcmp.ge.s32.totalorder %v1105, 0
    %vm1115 = vmand %vm1112, %vm1114
    %vm1116 = vmand %vm1113, %vm1114
    %vm1117 = vmand %vm1115, %vm1106
    %vm1118 = vmand %vm1116, %vm1107
    %vm1119 = vcmp.ge.s32.totalorder %v1102, 8
    %vm1120 = vcmp.ge.s32.totalorder %v1103, 8
    %vm1121 = vcmp.lt.s32.totalorder %v1102, 16
    %vm1122 = vcmp.lt.s32.totalorder %v1103, 16
    %vm1123 = vmand %vm1119, %vm1121
    %vm1124 = vmand %vm1120, %vm1122
    %vm1125 = vcmp.ge.s32.totalorder %v1105, 8
    %vm1126 = vmand %vm1123, %vm1125
    %vm1127 = vmand %vm1124, %vm1125
    %vm1128 = vmand %vm1126, %vm1106
    %vm1129 = vmand %vm1127, %vm1107
    %vm1130 = vmor %vm1117, %vm1128
    %vm1131 = vmor %vm1118, %vm1129
    %v1132 = vsel %vm1130, %v1093, -1e+30
    %v1133 = vsel %vm1131, %v1098, -1e+30
    %vm1134 = vcmask 130048
    %v1135 = vsel %vm1134, %v1132, -inf
    %1136 = vmax.xlane.f32.xlu0 %v1135
    %v1137 = vpop.xlane.xlu0 %1136
    %v1138 = vsel %vm1134, %v1133, -inf
    %1139 = vmax.xlane.f32.xlu0 %v1138
    %v1140 = vpop.xlane.xlu0 %1139
    %v1141 = vsub.f32 %v1132, %v1137
    %v1142 = vsub.f32 %v1133, %v1140
    %v1143 = vmul.f32 %v1141, 1.442695
    %v1144 = vpow.pop %v1143
    %v1145 = vmul.f32 %v1142, 1.442695
    %v1146 = vpow.pop %v1145
    %v1147 = vsel %vm1134, %v1144, 0.0
    %1148 = vadd.xlane.f32.xlu0 %v1147
    %v1149 = vpop.xlane.xlu0 %1148
    %v1150 = vsel %vm1134, %v1146, 0.0
    %1151 = vadd.xlane.f32.xlu0 %v1150
    %v1152 = vpop.xlane.xlu0 %1151
    %v1153 = vrcp.pop %v1149
    %v1154 = vmul.f32 %v1144, %v1153
    %v1155 = vrcp.pop %v1152
    %v1156 = vmul.f32 %v1146, %v1155
    %v1158 = vsel %vm1134, %v1154, 0
    %v1161 = vsel %vm1134, %v1156, 0
    %1163 = vmatprep.subr.mxu0 0.0
    %1164 = vmatpush1.msra.mxu0 0.0
    %1165 = vmatprep.subr.mxu0 0.0
    %1166 = vmatpush1.msra.mxu0 0.0
    %1167 = vmatprep.subr.mxu0 0.0
    %1168 = vmatpush1.msra.mxu0 0.0
    %1169 = vmatprep.subr.mxu0 0.0
    %1170 = vmatpush1.msra.mxu0 0.0
    %1171 = vmatprep.subr.mxu0 0.0
    %1172 = vmatpush1.msra.mxu0 0.0
    %1173 = vmatprep.subr.mxu0 0.0
    %1174 = vmatpush1.msra.mxu0 0.0
    %1175 = vmatprep.subr.mxu0 0.0
    %1176 = vmatpush1.msra.mxu0 0.0
    %1177 = vmatprep.subr.mxu0 0.0
    %1178 = vmatpush1.msra.mxu0 0.0
    %1179 = vmatprep.subr.mxu0 0.0
    %1180 = vmatpush1.msra.mxu0 0.0
    %1181 = vmatprep.subr.mxu0 0.0
    %1182 = vmatpush1.msra.mxu0 0.0
    %1183 = vmatprep.subr.mxu0 0.0
    %1184 = vmatpush1.msra.mxu0 0.0
    %1185 = vmatprep.subr.mxu0 0.0
    %1186 = vmatpush1.msra.mxu0 0.0
    %1187 = vmatprep.subr.mxu0 0.0
    %1188 = vmatpush1.msra.mxu0 0.0
    %1189 = vmatprep.subr.mxu0 0.0
    %1190 = vmatpush1.msra.mxu0 0.0
    %1191 = vmatprep.subr.mxu0 0.0
    %1192 = vmatpush1.msra.mxu0 %v1025
    %1193 = vmatprep.subr.mxu0 0.0
    %1194 = vmatpush1.msra.mxu0 %v1024
    %1195 = vmatprep.subr.mxu0 0.0
    %1196 = vmatpush2.msra.mxu0 0.0
    %1197 = vmatprep.subr.mxu0 0.0
    %1198 = vmatpush2.msra.mxu0 0.0
    %1199 = vmatprep.subr.mxu0 0.0
    %1200 = vmatpush2.msra.mxu0 0.0
    %1201 = vmatprep.subr.mxu0 0.0
    %1202 = vmatpush2.msra.mxu0 0.0
    %1203 = vmatprep.subr.mxu0 0.0
    %1204 = vmatpush2.msra.mxu0 0.0
    %1205 = vmatprep.subr.mxu0 0.0
    %1206 = vmatpush2.msra.mxu0 0.0
    %1207 = vmatprep.subr.mxu0 0.0
    %1208 = vmatpush2.msra.mxu0 0.0
    %1209 = vmatprep.subr.mxu0 0.0
    %1210 = vmatpush2.msra.mxu0 0.0
    %1211 = vmatprep.subr.mxu0 0.0
    %1212 = vmatpush2.msra.mxu0 0.0
    %1213 = vmatprep.subr.mxu0 0.0
    %1214 = vmatpush2.msra.mxu0 0.0
    %1215 = vmatprep.subr.mxu0 0.0
    %1216 = vmatpush2.msra.mxu0 0.0
    %1217 = vmatprep.subr.mxu0 0.0
    %1218 = vmatpush2.msra.mxu0 0.0
    %1219 = vmatprep.subr.mxu0 0.0
    %1220 = vmatpush2.msra.mxu0 0.0
    %1221 = vmatprep.subr.mxu0 0.0
    %1222 = vmatpush2.msra.mxu0 0.0
    %1223 = vmatprep.subr.mxu0 0.0
    %1224 = vmatpush2.msra.mxu0 0.0
    %1225 = vmatprep.subr.mxu0 0.0
    %1226 = vmatpush2.msra.mxu0 0.0
    %1227 = vmatprep.mubr.f32.mxu0 0.0
    %1228 = vmatmul.mubr.f32.gmra.mxu0 %v1158
    %v1229 = vpop.f32.mrf.mxu0
    %v1230 = vadd.f32 0.0, %v1229
    %v1231 = vpop.f32.mrf.mxu0
    %1232 = vmatprep.mubr.f32.mxu0 0.0
    %1233 = vmatmul.mubr.f32.gmra.mxu0 %v1161
    %v1234 = vpop.f32.mrf.mxu0
    %v1235 = vadd.f32 0.0, %v1234
    %v1236 = vpop.f32.mrf.mxu0
    %1237 = vdwg.mxu0
    %v1238 = vld [vmem:[%s8 + $0x4] sm:$0x1]
    %v1239 = vlaneseq
    %v1240 = vshrl.u32 %v1239, 7
    %v1241 = vsub.s32 0, %v1240
    %v1242 = vrot.slane %v1238, %v1241
    %1243 = vmatprep.subr.mxu0 0.0
    %1244 = vmatpush1.msra.mxu0 %v100
    %1245 = vmatprep.subr.mxu0 0.0
    %1246 = vmatpush1.msra.mxu0 %v99
    %1247 = vmatprep.subr.mxu0 0.0
    %1248 = vmatpush1.msra.mxu0 %v98
    %1249 = vmatprep.subr.mxu0 0.0
    %1250 = vmatpush1.msra.mxu0 %v97
    %1251 = vmatprep.subr.mxu0 0.0
    %1252 = vmatpush1.msra.mxu0 %v96
    %1253 = vmatprep.subr.mxu0 0.0
    %1254 = vmatpush1.msra.mxu0 %v95
    %1255 = vmatprep.subr.mxu0 0.0
    %1256 = vmatpush1.msra.mxu0 %v94
    %1257 = vmatprep.subr.mxu0 0.0
    %1258 = vmatpush1.msra.mxu0 %v93
    %1259 = vmatprep.subr.mxu0 0.0
    %1260 = vmatpush1.msra.mxu0 %v92
    %1261 = vmatprep.subr.mxu0 0.0
    %1262 = vmatpush1.msra.mxu0 %v91
    %1263 = vmatprep.subr.mxu0 0.0
    %1264 = vmatpush1.msra.mxu0 %v90
    %1265 = vmatprep.subr.mxu0 0.0
    %1266 = vmatpush1.msra.mxu0 %v89
    %1267 = vmatprep.subr.mxu0 0.0
    %1268 = vmatpush1.msra.mxu0 %v88
    %1269 = vmatprep.subr.mxu0 0.0
    %1270 = vmatpush1.msra.mxu0 %v87
    %1271 = vmatprep.subr.mxu0 0.0
    %1272 = vmatpush1.msra.mxu0 %v86
    %1273 = vmatprep.subr.mxu0 0.0
    %1274 = vmatpush1.msra.mxu0 %v85
    %1275 = vmatprep.subr.mxu0 0.0
    %1276 = vmatpush2.msra.mxu0 0.0
    %1277 = vmatprep.subr.mxu0 0.0
    %1278 = vmatpush2.msra.mxu0 0.0
    %1279 = vmatprep.subr.mxu0 0.0
    %1280 = vmatpush2.msra.mxu0 0.0
    %1281 = vmatprep.subr.mxu0 0.0
    %1282 = vmatpush2.msra.mxu0 0.0
    %1283 = vmatprep.subr.mxu0 0.0
    %1284 = vmatpush2.msra.mxu0 0.0
    %1285 = vmatprep.subr.mxu0 0.0
    %1286 = vmatpush2.msra.mxu0 0.0
    %1287 = vmatprep.subr.mxu0 0.0
    %1288 = vmatpush2.msra.mxu0 0.0
    %1289 = vmatprep.subr.mxu0 0.0
    %1290 = vmatpush2.msra.mxu0 0.0
    %1291 = vmatprep.subr.mxu0 0.0
    %1292 = vmatpush2.msra.mxu0 0.0
    %1293 = vmatprep.subr.mxu0 0.0
    %1294 = vmatpush2.msra.mxu0 0.0
    %1295 = vmatprep.subr.mxu0 0.0
    %1296 = vmatpush2.msra.mxu0 0.0
    %1297 = vmatprep.subr.mxu0 0.0
    %1298 = vmatpush2.msra.mxu0 0.0
    %1299 = vmatprep.subr.mxu0 0.0
    %1300 = vmatpush2.msra.mxu0 0.0
    %1301 = vmatprep.subr.mxu0 0.0
    %1302 = vmatpush2.msra.mxu0 0.0
    %1303 = vmatprep.subr.mxu0 0.0
    %1304 = vmatpush2.msra.mxu0 0.0
    %1305 = vmatprep.subr.mxu0 0.0
    %1306 = vmatpush2.msra.mxu0 0.0
    %1307 = vmatprep.mubr.f32.mxu0 0.0
    %1308 = vmatmul.mubr.f32.gmra.mxu0 %v1230
    %v1309 = vpop.f32.mrf.mxu0
    %v1310 = vadd.f32 %v1242, %v1309
    %v1311 = vpop.f32.mrf.mxu0
    %1312 = vmatprep.mubr.f32.mxu0 0.0
    %1313 = vmatmul.mubr.f32.gmra.mxu0 %v1235
    %v1314 = vpop.f32.mrf.mxu0
    %v1315 = vadd.f32 %v1242, %v1314
    %v1316 = vpop.f32.mrf.mxu0
    %1317 = vdwg.mxu0
    %v1318 = vstv %s37
    %v1319 = vmul.f32 %v1318, %v1310
    %v1320 = vmul.f32 %v1318, %v1315
    %v1321 = vadd.f32 %v828, %v1319
    %v1322 = vadd.f32 %v833, %v1320
    %v1323 = vld [vmem:[%s5] sm:$0xff]
    %v1324 = vld [vmem:[%s5 + $0x8] sm:$0xff]
    %v1327 = vlaneseq
    %v1328 = vshrl.u32 %v1327, 7
    %v1329 = vsub.s32 0, %v1328
    %v1330 = vrot.slane %v1323, %v1329
    %v1331 = vlaneseq
    %v1332 = vshrl.u32 %v1331, 7
    %v1333 = vsub.s32 1, %v1332
    %v1334 = vrot.slane %v1323, %v1333
    %v1335 = vlaneseq
    %v1336 = vshrl.u32 %v1335, 7
    %v1337 = vsub.s32 2, %v1336
    %v1338 = vrot.slane %v1323, %v1337
    %v1339 = vlaneseq
    %v1340 = vshrl.u32 %v1339, 7
    %v1341 = vsub.s32 3, %v1340
    %v1342 = vrot.slane %v1323, %v1341
    %v1343 = vlaneseq
    %v1344 = vshrl.u32 %v1343, 7
    %v1345 = vsub.s32 4, %v1344
    %v1346 = vrot.slane %v1323, %v1345
    %v1347 = vlaneseq
    %v1348 = vshrl.u32 %v1347, 7
    %v1349 = vsub.s32 5, %v1348
    %v1350 = vrot.slane %v1323, %v1349
    %v1351 = vlaneseq
    %v1352 = vshrl.u32 %v1351, 7
    %v1353 = vsub.s32 6, %v1352
    %v1354 = vrot.slane %v1323, %v1353
    %v1355 = vlaneseq
    %v1356 = vshrl.u32 %v1355, 7
    %v1357 = vsub.s32 7, %v1356
    %v1358 = vrot.slane %v1323, %v1357
    %v1359 = vlaneseq
    %v1360 = vshrl.u32 %v1359, 7
    %v1361 = vsub.s32 0, %v1360
    %v1362 = vrot.slane %v1324, %v1361
    %v1363 = vlaneseq
    %v1364 = vshrl.u32 %v1363, 7
    %v1365 = vsub.s32 1, %v1364
    %v1366 = vrot.slane %v1324, %v1365
    %v1367 = vlaneseq
    %v1368 = vshrl.u32 %v1367, 7
    %v1369 = vsub.s32 2, %v1368
    %v1370 = vrot.slane %v1324, %v1369
    %v1371 = vlaneseq
    %v1372 = vshrl.u32 %v1371, 7
    %v1373 = vsub.s32 3, %v1372
    %v1374 = vrot.slane %v1324, %v1373
    %v1375 = vlaneseq
    %v1376 = vshrl.u32 %v1375, 7
    %v1377 = vsub.s32 4, %v1376
    %v1378 = vrot.slane %v1324, %v1377
    %v1379 = vlaneseq
    %v1380 = vshrl.u32 %v1379, 7
    %v1381 = vsub.s32 5, %v1380
    %v1382 = vrot.slane %v1324, %v1381
    %v1383 = vlaneseq
    %v1384 = vshrl.u32 %v1383, 7
    %v1385 = vsub.s32 6, %v1384
    %v1386 = vrot.slane %v1324, %v1385
    %v1387 = vlaneseq
    %v1388 = vshrl.u32 %v1387, 7
    %v1389 = vsub.s32 7, %v1388
    %v1390 = vrot.slane %v1324, %v1389
    %v1408 = vsel %vm836, %v1321, 0
    %v1411 = vsel %vm836, %v1322, 0
    %v1414 = vsel %vm843, %v205, 0
    %v1417 = vsel %vm843, %v206, 0
    %v1420 = vsel %vm843, %v207, 0
    %v1423 = vsel %vm843, %v208, 0
    %v1426 = vsel %vm843, %v209, 0
    %v1429 = vsel %vm843, %v210, 0
    %v1432 = vsel %vm843, %v211, 0
    %v1435 = vsel %vm843, %v212, 0
    %v1438 = vsel %vm843, %v213, 0
    %v1441 = vsel %vm843, %v214, 0
    %v1444 = vsel %vm843, %v215, 0
    %v1447 = vsel %vm843, %v216, 0
    %v1450 = vsel %vm843, %v217, 0
    %v1453 = vsel %vm843, %v218, 0
    %v1456 = vsel %vm843, %v219, 0
    %v1459 = vsel %vm843, %v220, 0
    %1461 = vmatprep.subr.mxu0 0.0
    %1462 = vmatpush1.msra.mxu0 0.0
    %1463 = vmatprep.subr.mxu0 0.0
    %1464 = vmatpush1.msra.mxu0 0.0
    %1465 = vmatprep.subr.mxu0 0.0
    %1466 = vmatpush1.msra.mxu0 0.0
    %1467 = vmatprep.subr.mxu0 0.0
    %1468 = vmatpush1.msra.mxu0 0.0
    %1469 = vmatprep.subr.mxu0 0.0
    %1470 = vmatpush1.msra.mxu0 0.0
    %1471 = vmatprep.subr.mxu0 0.0
    %1472 = vmatpush1.msra.mxu0 0.0
    %1473 = vmatprep.subr.mxu0 0.0
    %1474 = vmatpush1.msra.mxu0 0.0
    %1475 = vmatprep.subr.mxu0 0.0
    %1476 = vmatpush1.msra.mxu0 0.0
    %1477 = vmatprep.subr.mxu0 0.0
    %1478 = vmatpush1.msra.mxu0 0.0
    %1479 = vmatprep.subr.mxu0 0.0
    %1480 = vmatpush1.msra.mxu0 0.0
    %1481 = vmatprep.subr.mxu0 0.0
    %1482 = vmatpush1.msra.mxu0 0.0
    %1483 = vmatprep.subr.mxu0 %v1417
    %1484 = vmatpush1.msra.mxu0 %v1414
    %1485 = vmatprep.subr.mxu0 %v190
    %1486 = vmatpush1.msra.mxu0 %v189
    %1487 = vmatprep.subr.mxu0 %v174
    %1488 = vmatpush1.msra.mxu0 %v173
    %1489 = vmatprep.subr.mxu0 %v158
    %1490 = vmatpush1.msra.mxu0 %v157
    %1491 = vmatprep.subr.mxu0 %v142
    %1492 = vmatpush1.msra.mxu0 %v141
    %1493 = vmatprep.subr.mxu0 0.0
    %1494 = vmatpush2.msra.mxu0 0.0
    %1495 = vmatprep.subr.mxu0 0.0
    %1496 = vmatpush2.msra.mxu0 0.0
    %1497 = vmatprep.subr.mxu0 0.0
    %1498 = vmatpush2.msra.mxu0 0.0
    %1499 = vmatprep.subr.mxu0 0.0
    %1500 = vmatpush2.msra.mxu0 0.0
    %1501 = vmatprep.subr.mxu0 0.0
    %1502 = vmatpush2.msra.mxu0 0.0
    %1503 = vmatprep.subr.mxu0 0.0
    %1504 = vmatpush2.msra.mxu0 0.0
    %1505 = vmatprep.subr.mxu0 0.0
    %1506 = vmatpush2.msra.mxu0 0.0
    %1507 = vmatprep.subr.mxu0 0.0
    %1508 = vmatpush2.msra.mxu0 0.0
    %1509 = vmatprep.subr.mxu0 0.0
    %1510 = vmatpush2.msra.mxu0 0.0
    %1511 = vmatprep.subr.mxu0 0.0
    %1512 = vmatpush2.msra.mxu0 0.0
    %1513 = vmatprep.subr.mxu0 0.0
    %1514 = vmatpush2.msra.mxu0 0.0
    %1515 = vmatprep.subr.mxu0 0.0
    %1516 = vmatpush2.msra.mxu0 0.0
    %1517 = vmatprep.subr.mxu0 0.0
    %1518 = vmatpush2.msra.mxu0 0.0
    %1519 = vmatprep.subr.mxu0 0.0
    %1520 = vmatpush2.msra.mxu0 0.0
    %1521 = vmatprep.subr.mxu0 0.0
    %1522 = vmatpush2.msra.mxu0 0.0
    %1523 = vmatprep.subr.mxu0 0.0
    %1524 = vmatpush2.msra.mxu0 0.0
    %1525 = vmatprep.mubr.f32.mxu0 0.0
    %1526 = vmatmul.mubr.f32.gmra.mxu0 %v1408
    %v1527 = vpop.f32.mrf.mxu0
    %v1528 = vadd.f32 %v1330, %v1527
    %v1529 = vpop.f32.mrf.mxu0
    %v1530 = vadd.f32 %v1334, %v1529
    %1531 = vmatprep.mubr.f32.mxu0 0.0
    %1532 = vmatmul.mubr.f32.gmra.mxu0 %v1411
    %v1533 = vpop.f32.mrf.mxu0
    %v1534 = vadd.f32 %v1330, %v1533
    %v1535 = vpop.f32.mrf.mxu0
    %v1536 = vadd.f32 %v1334, %v1535
    %1537 = vdwg.mxu0
    %1538 = vmatprep.subr.mxu0 0.0
    %1539 = vmatpush1.msra.mxu0 0.0
    %1540 = vmatprep.subr.mxu0 0.0
    %1541 = vmatpush1.msra.mxu0 0.0
    %1542 = vmatprep.subr.mxu0 0.0
    %1543 = vmatpush1.msra.mxu0 0.0
    %1544 = vmatprep.subr.mxu0 0.0
    %1545 = vmatpush1.msra.mxu0 0.0
    %1546 = vmatprep.subr.mxu0 0.0
    %1547 = vmatpush1.msra.mxu0 0.0
    %1548 = vmatprep.subr.mxu0 0.0
    %1549 = vmatpush1.msra.mxu0 0.0
    %1550 = vmatprep.subr.mxu0 0.0
    %1551 = vmatpush1.msra.mxu0 0.0
    %1552 = vmatprep.subr.mxu0 0.0
    %1553 = vmatpush1.msra.mxu0 0.0
    %1554 = vmatprep.subr.mxu0 0.0
    %1555 = vmatpush1.msra.mxu0 0.0
    %1556 = vmatprep.subr.mxu0 0.0
    %1557 = vmatpush1.msra.mxu0 0.0
    %1558 = vmatprep.subr.mxu0 0.0
    %1559 = vmatpush1.msra.mxu0 0.0
    %1560 = vmatprep.subr.mxu0 %v1423
    %1561 = vmatpush1.msra.mxu0 %v1420
    %1562 = vmatprep.subr.mxu0 %v192
    %1563 = vmatpush1.msra.mxu0 %v191
    %1564 = vmatprep.subr.mxu0 %v176
    %1565 = vmatpush1.msra.mxu0 %v175
    %1566 = vmatprep.subr.mxu0 %v160
    %1567 = vmatpush1.msra.mxu0 %v159
    %1568 = vmatprep.subr.mxu0 %v144
    %1569 = vmatpush1.msra.mxu0 %v143
    %1570 = vmatprep.subr.mxu0 0.0
    %1571 = vmatpush2.msra.mxu0 0.0
    %1572 = vmatprep.subr.mxu0 0.0
    %1573 = vmatpush2.msra.mxu0 0.0
    %1574 = vmatprep.subr.mxu0 0.0
    %1575 = vmatpush2.msra.mxu0 0.0
    %1576 = vmatprep.subr.mxu0 0.0
    %1577 = vmatpush2.msra.mxu0 0.0
    %1578 = vmatprep.subr.mxu0 0.0
    %1579 = vmatpush2.msra.mxu0 0.0
    %1580 = vmatprep.subr.mxu0 0.0
    %1581 = vmatpush2.msra.mxu0 0.0
    %1582 = vmatprep.subr.mxu0 0.0
    %1583 = vmatpush2.msra.mxu0 0.0
    %1584 = vmatprep.subr.mxu0 0.0
    %1585 = vmatpush2.msra.mxu0 0.0
    %1586 = vmatprep.subr.mxu0 0.0
    %1587 = vmatpush2.msra.mxu0 0.0
    %1588 = vmatprep.subr.mxu0 0.0
    %1589 = vmatpush2.msra.mxu0 0.0
    %1590 = vmatprep.subr.mxu0 0.0
    %1591 = vmatpush2.msra.mxu0 0.0
    %1592 = vmatprep.subr.mxu0 0.0
    %1593 = vmatpush2.msra.mxu0 0.0
    %1594 = vmatprep.subr.mxu0 0.0
    %1595 = vmatpush2.msra.mxu0 0.0
    %1596 = vmatprep.subr.mxu0 0.0
    %1597 = vmatpush2.msra.mxu0 0.0
    %1598 = vmatprep.subr.mxu0 0.0
    %1599 = vmatpush2.msra.mxu0 0.0
    %1600 = vmatprep.subr.mxu0 0.0
    %1601 = vmatpush2.msra.mxu0 0.0
    %1602 = vmatprep.mubr.f32.mxu0 0.0
    %1603 = vmatmul.mubr.f32.gmra.mxu0 %v1408
    %v1604 = vpop.f32.mrf.mxu0
    %v1605 = vadd.f32 %v1338, %v1604
    %v1606 = vpop.f32.mrf.mxu0
    %v1607 = vadd.f32 %v1342, %v1606
    %1608 = vmatprep.mubr.f32.mxu0 0.0
    %1609 = vmatmul.mubr.f32.gmra.mxu0 %v1411
    %v1610 = vpop.f32.mrf.mxu0
    %v1611 = vadd.f32 %v1338, %v1610
    %v1612 = vpop.f32.mrf.mxu0
    %v1613 = vadd.f32 %v1342, %v1612
    %1614 = vdwg.mxu0
    %1615 = vmatprep.subr.mxu0 0.0
    %1616 = vmatpush1.msra.mxu0 0.0
    %1617 = vmatprep.subr.mxu0 0.0
    %1618 = vmatpush1.msra.mxu0 0.0
    %1619 = vmatprep.subr.mxu0 0.0
    %1620 = vmatpush1.msra.mxu0 0.0
    %1621 = vmatprep.subr.mxu0 0.0
    %1622 = vmatpush1.msra.mxu0 0.0
    %1623 = vmatprep.subr.mxu0 0.0
    %1624 = vmatpush1.msra.mxu0 0.0
    %1625 = vmatprep.subr.mxu0 0.0
    %1626 = vmatpush1.msra.mxu0 0.0
    %1627 = vmatprep.subr.mxu0 0.0
    %1628 = vmatpush1.msra.mxu0 0.0
    %1629 = vmatprep.subr.mxu0 0.0
    %1630 = vmatpush1.msra.mxu0 0.0
    %1631 = vmatprep.subr.mxu0 0.0
    %1632 = vmatpush1.msra.mxu0 0.0
    %1633 = vmatprep.subr.mxu0 0.0
    %1634 = vmatpush1.msra.mxu0 0.0
    %1635 = vmatprep.subr.mxu0 0.0
    %1636 = vmatpush1.msra.mxu0 0.0
    %1637 = vmatprep.subr.mxu0 %v1429
    %1638 = vmatpush1.msra.mxu0 %v1426
    %1639 = vmatprep.subr.mxu0 %v194
    %1640 = vmatpush1.msra.mxu0 %v193
    %1641 = vmatprep.subr.mxu0 %v178
    %1642 = vmatpush1.msra.mxu0 %v177
    %1643 = vmatprep.subr.mxu0 %v162
    %1644 = vmatpush1.msra.mxu0 %v161
    %1645 = vmatprep.subr.mxu0 %v146
    %1646 = vmatpush1.msra.mxu0 %v145
    %1647 = vmatprep.subr.mxu0 0.0
    %1648 = vmatpush2.msra.mxu0 0.0
    %1649 = vmatprep.subr.mxu0 0.0
    %1650 = vmatpush2.msra.mxu0 0.0
    %1651 = vmatprep.subr.mxu0 0.0
    %1652 = vmatpush2.msra.mxu0 0.0
    %1653 = vmatprep.subr.mxu0 0.0
    %1654 = vmatpush2.msra.mxu0 0.0
    %1655 = vmatprep.subr.mxu0 0.0
    %1656 = vmatpush2.msra.mxu0 0.0
    %1657 = vmatprep.subr.mxu0 0.0
    %1658 = vmatpush2.msra.mxu0 0.0
    %1659 = vmatprep.subr.mxu0 0.0
    %1660 = vmatpush2.msra.mxu0 0.0
    %1661 = vmatprep.subr.mxu0 0.0
    %1662 = vmatpush2.msra.mxu0 0.0
    %1663 = vmatprep.subr.mxu0 0.0
    %1664 = vmatpush2.msra.mxu0 0.0
    %1665 = vmatprep.subr.mxu0 0.0
    %1666 = vmatpush2.msra.mxu0 0.0
    %1667 = vmatprep.subr.mxu0 0.0
    %1668 = vmatpush2.msra.mxu0 0.0
    %1669 = vmatprep.subr.mxu0 0.0
    %1670 = vmatpush2.msra.mxu0 0.0
    %1671 = vmatprep.subr.mxu0 0.0
    %1672 = vmatpush2.msra.mxu0 0.0
    %1673 = vmatprep.subr.mxu0 0.0
    %1674 = vmatpush2.msra.mxu0 0.0
    %1675 = vmatprep.subr.mxu0 0.0
    %1676 = vmatpush2.msra.mxu0 0.0
    %1677 = vmatprep.subr.mxu0 0.0
    %1678 = vmatpush2.msra.mxu0 0.0
    %1679 = vmatprep.mubr.f32.mxu0 0.0
    %1680 = vmatmul.mubr.f32.gmra.mxu0 %v1408
    %v1681 = vpop.f32.mrf.mxu0
    %v1682 = vadd.f32 %v1346, %v1681
    %v1683 = vpop.f32.mrf.mxu0
    %v1684 = vadd.f32 %v1350, %v1683
    %1685 = vmatprep.mubr.f32.mxu0 0.0
    %1686 = vmatmul.mubr.f32.gmra.mxu0 %v1411
    %v1687 = vpop.f32.mrf.mxu0
    %v1688 = vadd.f32 %v1346, %v1687
    %v1689 = vpop.f32.mrf.mxu0
    %v1690 = vadd.f32 %v1350, %v1689
    %1691 = vdwg.mxu0
    %1692 = vmatprep.subr.mxu0 0.0
    %1693 = vmatpush1.msra.mxu0 0.0
    %1694 = vmatprep.subr.mxu0 0.0
    %1695 = vmatpush1.msra.mxu0 0.0
    %1696 = vmatprep.subr.mxu0 0.0
    %1697 = vmatpush1.msra.mxu0 0.0
    %1698 = vmatprep.subr.mxu0 0.0
    %1699 = vmatpush1.msra.mxu0 0.0
    %1700 = vmatprep.subr.mxu0 0.0
    %1701 = vmatpush1.msra.mxu0 0.0
    %1702 = vmatprep.subr.mxu0 0.0
    %1703 = vmatpush1.msra.mxu0 0.0
    %1704 = vmatprep.subr.mxu0 0.0
    %1705 = vmatpush1.msra.mxu0 0.0
    %1706 = vmatprep.subr.mxu0 0.0
    %1707 = vmatpush1.msra.mxu0 0.0
    %1708 = vmatprep.subr.mxu0 0.0
    %1709 = vmatpush1.msra.mxu0 0.0
    %1710 = vmatprep.subr.mxu0 0.0
    %1711 = vmatpush1.msra.mxu0 0.0
    %1712 = vmatprep.subr.mxu0 0.0
    %1713 = vmatpush1.msra.mxu0 0.0
    %1714 = vmatprep.subr.mxu0 %v1435
    %1715 = vmatpush1.msra.mxu0 %v1432
    %1716 = vmatprep.subr.mxu0 %v196
    %1717 = vmatpush1.msra.mxu0 %v195
    %1718 = vmatprep.subr.mxu0 %v180
    %1719 = vmatpush1.msra.mxu0 %v179
    %1720 = vmatprep.subr.mxu0 %v164
    %1721 = vmatpush1.msra.mxu0 %v163
    %1722 = vmatprep.subr.mxu0 %v148
    %1723 = vmatpush1.msra.mxu0 %v147
    %1724 = vmatprep.subr.mxu0 0.0
    %1725 = vmatpush2.msra.mxu0 0.0
    %1726 = vmatprep.subr.mxu0 0.0
    %1727 = vmatpush2.msra.mxu0 0.0
    %1728 = vmatprep.subr.mxu0 0.0
    %1729 = vmatpush2.msra.mxu0 0.0
    %1730 = vmatprep.subr.mxu0 0.0
    %1731 = vmatpush2.msra.mxu0 0.0
    %1732 = vmatprep.subr.mxu0 0.0
    %1733 = vmatpush2.msra.mxu0 0.0
    %1734 = vmatprep.subr.mxu0 0.0
    %1735 = vmatpush2.msra.mxu0 0.0
    %1736 = vmatprep.subr.mxu0 0.0
    %1737 = vmatpush2.msra.mxu0 0.0
    %1738 = vmatprep.subr.mxu0 0.0
    %1739 = vmatpush2.msra.mxu0 0.0
    %1740 = vmatprep.subr.mxu0 0.0
    %1741 = vmatpush2.msra.mxu0 0.0
    %1742 = vmatprep.subr.mxu0 0.0
    %1743 = vmatpush2.msra.mxu0 0.0
    %1744 = vmatprep.subr.mxu0 0.0
    %1745 = vmatpush2.msra.mxu0 0.0
    %1746 = vmatprep.subr.mxu0 0.0
    %1747 = vmatpush2.msra.mxu0 0.0
    %1748 = vmatprep.subr.mxu0 0.0
    %1749 = vmatpush2.msra.mxu0 0.0
    %1750 = vmatprep.subr.mxu0 0.0
    %1751 = vmatpush2.msra.mxu0 0.0
    %1752 = vmatprep.subr.mxu0 0.0
    %1753 = vmatpush2.msra.mxu0 0.0
    %1754 = vmatprep.subr.mxu0 0.0
    %1755 = vmatpush2.msra.mxu0 0.0
    %1756 = vmatprep.mubr.f32.mxu0 0.0
    %1757 = vmatmul.mubr.f32.gmra.mxu0 %v1408
    %v1758 = vpop.f32.mrf.mxu0
    %v1759 = vadd.f32 %v1354, %v1758
    %v1760 = vpop.f32.mrf.mxu0
    %v1761 = vadd.f32 %v1358, %v1760
    %1762 = vmatprep.mubr.f32.mxu0 0.0
    %1763 = vmatmul.mubr.f32.gmra.mxu0 %v1411
    %v1764 = vpop.f32.mrf.mxu0
    %v1765 = vadd.f32 %v1354, %v1764
    %v1766 = vpop.f32.mrf.mxu0
    %v1767 = vadd.f32 %v1358, %v1766
    %1768 = vdwg.mxu0
    %1769 = vmatprep.subr.mxu0 0.0
    %1770 = vmatpush1.msra.mxu0 0.0
    %1771 = vmatprep.subr.mxu0 0.0
    %1772 = vmatpush1.msra.mxu0 0.0
    %1773 = vmatprep.subr.mxu0 0.0
    %1774 = vmatpush1.msra.mxu0 0.0
    %1775 = vmatprep.subr.mxu0 0.0
    %1776 = vmatpush1.msra.mxu0 0.0
    %1777 = vmatprep.subr.mxu0 0.0
    %1778 = vmatpush1.msra.mxu0 0.0
    %1779 = vmatprep.subr.mxu0 0.0
    %1780 = vmatpush1.msra.mxu0 0.0
    %1781 = vmatprep.subr.mxu0 0.0
    %1782 = vmatpush1.msra.mxu0 0.0
    %1783 = vmatprep.subr.mxu0 0.0
    %1784 = vmatpush1.msra.mxu0 0.0
    %1785 = vmatprep.subr.mxu0 0.0
    %1786 = vmatpush1.msra.mxu0 0.0
    %1787 = vmatprep.subr.mxu0 0.0
    %1788 = vmatpush1.msra.mxu0 0.0
    %1789 = vmatprep.subr.mxu0 0.0
    %1790 = vmatpush1.msra.mxu0 0.0
    %1791 = vmatprep.subr.mxu0 %v1441
    %1792 = vmatpush1.msra.mxu0 %v1438
    %1793 = vmatprep.subr.mxu0 %v198
    %1794 = vmatpush1.msra.mxu0 %v197
    %1795 = vmatprep.subr.mxu0 %v182
    %1796 = vmatpush1.msra.mxu0 %v181
    %1797 = vmatprep.subr.mxu0 %v166
    %1798 = vmatpush1.msra.mxu0 %v165
    %1799 = vmatprep.subr.mxu0 %v150
    %1800 = vmatpush1.msra.mxu0 %v149
    %1801 = vmatprep.subr.mxu0 0.0
    %1802 = vmatpush2.msra.mxu0 0.0
    %1803 = vmatprep.subr.mxu0 0.0
    %1804 = vmatpush2.msra.mxu0 0.0
    %1805 = vmatprep.subr.mxu0 0.0
    %1806 = vmatpush2.msra.mxu0 0.0
    %1807 = vmatprep.subr.mxu0 0.0
    %1808 = vmatpush2.msra.mxu0 0.0
    %1809 = vmatprep.subr.mxu0 0.0
    %1810 = vmatpush2.msra.mxu0 0.0
    %1811 = vmatprep.subr.mxu0 0.0
    %1812 = vmatpush2.msra.mxu0 0.0
    %1813 = vmatprep.subr.mxu0 0.0
    %1814 = vmatpush2.msra.mxu0 0.0
    %1815 = vmatprep.subr.mxu0 0.0
    %1816 = vmatpush2.msra.mxu0 0.0
    %1817 = vmatprep.subr.mxu0 0.0
    %1818 = vmatpush2.msra.mxu0 0.0
    %1819 = vmatprep.subr.mxu0 0.0
    %1820 = vmatpush2.msra.mxu0 0.0
    %1821 = vmatprep.subr.mxu0 0.0
    %1822 = vmatpush2.msra.mxu0 0.0
    %1823 = vmatprep.subr.mxu0 0.0
    %1824 = vmatpush2.msra.mxu0 0.0
    %1825 = vmatprep.subr.mxu0 0.0
    %1826 = vmatpush2.msra.mxu0 0.0
    %1827 = vmatprep.subr.mxu0 0.0
    %1828 = vmatpush2.msra.mxu0 0.0
    %1829 = vmatprep.subr.mxu0 0.0
    %1830 = vmatpush2.msra.mxu0 0.0
    %1831 = vmatprep.subr.mxu0 0.0
    %1832 = vmatpush2.msra.mxu0 0.0
    %1833 = vmatprep.mubr.f32.mxu0 0.0
    %1834 = vmatmul.mubr.f32.gmra.mxu0 %v1408
    %v1835 = vpop.f32.mrf.mxu0
    %v1836 = vadd.f32 %v1362, %v1835
    %v1837 = vpop.f32.mrf.mxu0
    %v1838 = vadd.f32 %v1366, %v1837
    %1839 = vmatprep.mubr.f32.mxu0 0.0
    %1840 = vmatmul.mubr.f32.gmra.mxu0 %v1411
    %v1841 = vpop.f32.mrf.mxu0
    %v1842 = vadd.f32 %v1362, %v1841
    %v1843 = vpop.f32.mrf.mxu0
    %v1844 = vadd.f32 %v1366, %v1843
    %1845 = vdwg.mxu0
    %1846 = vmatprep.subr.mxu0 0.0
    %1847 = vmatpush1.msra.mxu0 0.0
    %1848 = vmatprep.subr.mxu0 0.0
    %1849 = vmatpush1.msra.mxu0 0.0
    %1850 = vmatprep.subr.mxu0 0.0
    %1851 = vmatpush1.msra.mxu0 0.0
    %1852 = vmatprep.subr.mxu0 0.0
    %1853 = vmatpush1.msra.mxu0 0.0
    %1854 = vmatprep.subr.mxu0 0.0
    %1855 = vmatpush1.msra.mxu0 0.0
    %1856 = vmatprep.subr.mxu0 0.0
    %1857 = vmatpush1.msra.mxu0 0.0
    %1858 = vmatprep.subr.mxu0 0.0
    %1859 = vmatpush1.msra.mxu0 0.0
    %1860 = vmatprep.subr.mxu0 0.0
    %1861 = vmatpush1.msra.mxu0 0.0
    %1862 = vmatprep.subr.mxu0 0.0
    %1863 = vmatpush1.msra.mxu0 0.0
    %1864 = vmatprep.subr.mxu0 0.0
    %1865 = vmatpush1.msra.mxu0 0.0
    %1866 = vmatprep.subr.mxu0 0.0
    %1867 = vmatpush1.msra.mxu0 0.0
    %1868 = vmatprep.subr.mxu0 %v1447
    %1869 = vmatpush1.msra.mxu0 %v1444
    %1870 = vmatprep.subr.mxu0 %v200
    %1871 = vmatpush1.msra.mxu0 %v199
    %1872 = vmatprep.subr.mxu0 %v184
    %1873 = vmatpush1.msra.mxu0 %v183
    %1874 = vmatprep.subr.mxu0 %v168
    %1875 = vmatpush1.msra.mxu0 %v167
    %1876 = vmatprep.subr.mxu0 %v152
    %1877 = vmatpush1.msra.mxu0 %v151
    %1878 = vmatprep.subr.mxu0 0.0
    %1879 = vmatpush2.msra.mxu0 0.0
    %1880 = vmatprep.subr.mxu0 0.0
    %1881 = vmatpush2.msra.mxu0 0.0
    %1882 = vmatprep.subr.mxu0 0.0
    %1883 = vmatpush2.msra.mxu0 0.0
    %1884 = vmatprep.subr.mxu0 0.0
    %1885 = vmatpush2.msra.mxu0 0.0
    %1886 = vmatprep.subr.mxu0 0.0
    %1887 = vmatpush2.msra.mxu0 0.0
    %1888 = vmatprep.subr.mxu0 0.0
    %1889 = vmatpush2.msra.mxu0 0.0
    %1890 = vmatprep.subr.mxu0 0.0
    %1891 = vmatpush2.msra.mxu0 0.0
    %1892 = vmatprep.subr.mxu0 0.0
    %1893 = vmatpush2.msra.mxu0 0.0
    %1894 = vmatprep.subr.mxu0 0.0
    %1895 = vmatpush2.msra.mxu0 0.0
    %1896 = vmatprep.subr.mxu0 0.0
    %1897 = vmatpush2.msra.mxu0 0.0
    %1898 = vmatprep.subr.mxu0 0.0
    %1899 = vmatpush2.msra.mxu0 0.0
    %1900 = vmatprep.subr.mxu0 0.0
    %1901 = vmatpush2.msra.mxu0 0.0
    %1902 = vmatprep.subr.mxu0 0.0
    %1903 = vmatpush2.msra.mxu0 0.0
    %1904 = vmatprep.subr.mxu0 0.0
    %1905 = vmatpush2.msra.mxu0 0.0
    %1906 = vmatprep.subr.mxu0 0.0
    %1907 = vmatpush2.msra.mxu0 0.0
    %1908 = vmatprep.subr.mxu0 0.0
    %1909 = vmatpush2.msra.mxu0 0.0
    %1910 = vmatprep.mubr.f32.mxu0 0.0
    %1911 = vmatmul.mubr.f32.gmra.mxu0 %v1408
    %v1912 = vpop.f32.mrf.mxu0
    %v1913 = vadd.f32 %v1370, %v1912
    %v1914 = vpop.f32.mrf.mxu0
    %v1915 = vadd.f32 %v1374, %v1914
    %1916 = vmatprep.mubr.f32.mxu0 0.0
    %1917 = vmatmul.mubr.f32.gmra.mxu0 %v1411
    %v1918 = vpop.f32.mrf.mxu0
    %v1919 = vadd.f32 %v1370, %v1918
    %v1920 = vpop.f32.mrf.mxu0
    %v1921 = vadd.f32 %v1374, %v1920
    %1922 = vdwg.mxu0
    %1923 = vmatprep.subr.mxu0 0.0
    %1924 = vmatpush1.msra.mxu0 0.0
    %1925 = vmatprep.subr.mxu0 0.0
    %1926 = vmatpush1.msra.mxu0 0.0
    %1927 = vmatprep.subr.mxu0 0.0
    %1928 = vmatpush1.msra.mxu0 0.0
    %1929 = vmatprep.subr.mxu0 0.0
    %1930 = vmatpush1.msra.mxu0 0.0
    %1931 = vmatprep.subr.mxu0 0.0
    %1932 = vmatpush1.msra.mxu0 0.0
    %1933 = vmatprep.subr.mxu0 0.0
    %1934 = vmatpush1.msra.mxu0 0.0
    %1935 = vmatprep.subr.mxu0 0.0
    %1936 = vmatpush1.msra.mxu0 0.0
    %1937 = vmatprep.subr.mxu0 0.0
    %1938 = vmatpush1.msra.mxu0 0.0
    %1939 = vmatprep.subr.mxu0 0.0
    %1940 = vmatpush1.msra.mxu0 0.0
    %1941 = vmatprep.subr.mxu0 0.0
    %1942 = vmatpush1.msra.mxu0 0.0
    %1943 = vmatprep.subr.mxu0 0.0
    %1944 = vmatpush1.msra.mxu0 0.0
    %1945 = vmatprep.subr.mxu0 %v1453
    %1946 = vmatpush1.msra.mxu0 %v1450
    %1947 = vmatprep.subr.mxu0 %v202
    %1948 = vmatpush1.msra.mxu0 %v201
    %1949 = vmatprep.subr.mxu0 %v186
    %1950 = vmatpush1.msra.mxu0 %v185
    %1951 = vmatprep.subr.mxu0 %v170
    %1952 = vmatpush1.msra.mxu0 %v169
    %1953 = vmatprep.subr.mxu0 %v154
    %1954 = vmatpush1.msra.mxu0 %v153
    %1955 = vmatprep.subr.mxu0 0.0
    %1956 = vmatpush2.msra.mxu0 0.0
    %1957 = vmatprep.subr.mxu0 0.0
    %1958 = vmatpush2.msra.mxu0 0.0
    %1959 = vmatprep.subr.mxu0 0.0
    %1960 = vmatpush2.msra.mxu0 0.0
    %1961 = vmatprep.subr.mxu0 0.0
    %1962 = vmatpush2.msra.mxu0 0.0
    %1963 = vmatprep.subr.mxu0 0.0
    %1964 = vmatpush2.msra.mxu0 0.0
    %1965 = vmatprep.subr.mxu0 0.0
    %1966 = vmatpush2.msra.mxu0 0.0
    %1967 = vmatprep.subr.mxu0 0.0
    %1968 = vmatpush2.msra.mxu0 0.0
    %1969 = vmatprep.subr.mxu0 0.0
    %1970 = vmatpush2.msra.mxu0 0.0
    %1971 = vmatprep.subr.mxu0 0.0
    %1972 = vmatpush2.msra.mxu0 0.0
    %1973 = vmatprep.subr.mxu0 0.0
    %1974 = vmatpush2.msra.mxu0 0.0
    %1975 = vmatprep.subr.mxu0 0.0
    %1976 = vmatpush2.msra.mxu0 0.0
    %1977 = vmatprep.subr.mxu0 0.0
    %1978 = vmatpush2.msra.mxu0 0.0
    %1979 = vmatprep.subr.mxu0 0.0
    %1980 = vmatpush2.msra.mxu0 0.0
    %1981 = vmatprep.subr.mxu0 0.0
    %1982 = vmatpush2.msra.mxu0 0.0
    %1983 = vmatprep.subr.mxu0 0.0
    %1984 = vmatpush2.msra.mxu0 0.0
    %1985 = vmatprep.subr.mxu0 0.0
    %1986 = vmatpush2.msra.mxu0 0.0
    %1987 = vmatprep.mubr.f32.mxu0 0.0
    %1988 = vmatmul.mubr.f32.gmra.mxu0 %v1408
    %v1989 = vpop.f32.mrf.mxu0
    %v1990 = vadd.f32 %v1378, %v1989
    %v1991 = vpop.f32.mrf.mxu0
    %v1992 = vadd.f32 %v1382, %v1991
    %1993 = vmatprep.mubr.f32.mxu0 0.0
    %1994 = vmatmul.mubr.f32.gmra.mxu0 %v1411
    %v1995 = vpop.f32.mrf.mxu0
    %v1996 = vadd.f32 %v1378, %v1995
    %v1997 = vpop.f32.mrf.mxu0
    %v1998 = vadd.f32 %v1382, %v1997
    %1999 = vdwg.mxu0
    %2000 = vmatprep.subr.mxu0 0.0
    %2001 = vmatpush1.msra.mxu0 0.0
    %2002 = vmatprep.subr.mxu0 0.0
    %2003 = vmatpush1.msra.mxu0 0.0
    %2004 = vmatprep.subr.mxu0 0.0
    %2005 = vmatpush1.msra.mxu0 0.0
    %2006 = vmatprep.subr.mxu0 0.0
    %2007 = vmatpush1.msra.mxu0 0.0
    %2008 = vmatprep.subr.mxu0 0.0
    %2009 = vmatpush1.msra.mxu0 0.0
    %2010 = vmatprep.subr.mxu0 0.0
    %2011 = vmatpush1.msra.mxu0 0.0
    %2012 = vmatprep.subr.mxu0 0.0
    %2013 = vmatpush1.msra.mxu0 0.0
    %2014 = vmatprep.subr.mxu0 0.0
    %2015 = vmatpush1.msra.mxu0 0.0
    %2016 = vmatprep.subr.mxu0 0.0
    %2017 = vmatpush1.msra.mxu0 0.0
    %2018 = vmatprep.subr.mxu0 0.0
    %2019 = vmatpush1.msra.mxu0 0.0
    %2020 = vmatprep.subr.mxu0 0.0
    %2021 = vmatpush1.msra.mxu0 0.0
    %2022 = vmatprep.subr.mxu0 %v1459
    %2023 = vmatpush1.msra.mxu0 %v1456
    %2024 = vmatprep.subr.mxu0 %v204
    %2025 = vmatpush1.msra.mxu0 %v203
    %2026 = vmatprep.subr.mxu0 %v188
    %2027 = vmatpush1.msra.mxu0 %v187
    %2028 = vmatprep.subr.mxu0 %v172
    %2029 = vmatpush1.msra.mxu0 %v171
    %2030 = vmatprep.subr.mxu0 %v156
    %2031 = vmatpush1.msra.mxu0 %v155
    %2032 = vmatprep.subr.mxu0 0.0
    %2033 = vmatpush2.msra.mxu0 0.0
    %2034 = vmatprep.subr.mxu0 0.0
    %2035 = vmatpush2.msra.mxu0 0.0
    %2036 = vmatprep.subr.mxu0 0.0
    %2037 = vmatpush2.msra.mxu0 0.0
    %2038 = vmatprep.subr.mxu0 0.0
    %2039 = vmatpush2.msra.mxu0 0.0
    %2040 = vmatprep.subr.mxu0 0.0
    %2041 = vmatpush2.msra.mxu0 0.0
    %2042 = vmatprep.subr.mxu0 0.0
    %2043 = vmatpush2.msra.mxu0 0.0
    %2044 = vmatprep.subr.mxu0 0.0
    %2045 = vmatpush2.msra.mxu0 0.0
    %2046 = vmatprep.subr.mxu0 0.0
    %2047 = vmatpush2.msra.mxu0 0.0
    %2048 = vmatprep.subr.mxu0 0.0
    %2049 = vmatpush2.msra.mxu0 0.0
    %2050 = vmatprep.subr.mxu0 0.0
    %2051 = vmatpush2.msra.mxu0 0.0
    %2052 = vmatprep.subr.mxu0 0.0
    %2053 = vmatpush2.msra.mxu0 0.0
    %2054 = vmatprep.subr.mxu0 0.0
    %2055 = vmatpush2.msra.mxu0 0.0
    %2056 = vmatprep.subr.mxu0 0.0
    %2057 = vmatpush2.msra.mxu0 0.0
    %2058 = vmatprep.subr.mxu0 0.0
    %2059 = vmatpush2.msra.mxu0 0.0
    %2060 = vmatprep.subr.mxu0 0.0
    %2061 = vmatpush2.msra.mxu0 0.0
    %2062 = vmatprep.subr.mxu0 0.0
    %2063 = vmatpush2.msra.mxu0 0.0
    %2064 = vmatprep.mubr.f32.mxu0 0.0
    %2065 = vmatmul.mubr.f32.gmra.mxu0 %v1408
    %v2066 = vpop.f32.mrf.mxu0
    %v2067 = vadd.f32 %v1386, %v2066
    %v2068 = vpop.f32.mrf.mxu0
    %v2069 = vadd.f32 %v1390, %v2068
    %2070 = vmatprep.mubr.f32.mxu0 0.0
    %2071 = vmatmul.mubr.f32.gmra.mxu0 %v1411
    %v2072 = vpop.f32.mrf.mxu0
    %v2073 = vadd.f32 %v1386, %v2072
    %v2074 = vpop.f32.mrf.mxu0
    %v2075 = vadd.f32 %v1390, %v2074
    %2076 = vdwg.mxu0
    %v2077 = vmax.f32 %v1528, 0.0
    %v2078 = vmax.f32 %v1530, 0.0
    %v2079 = vmax.f32 %v1605, 0.0
    %v2080 = vmax.f32 %v1607, 0.0
    %v2081 = vmax.f32 %v1682, 0.0
    %v2082 = vmax.f32 %v1684, 0.0
    %v2083 = vmax.f32 %v1759, 0.0
    %v2084 = vmax.f32 %v1761, 0.0
    %v2085 = vmax.f32 %v1836, 0.0
    %v2086 = vmax.f32 %v1838, 0.0
    %v2087 = vmax.f32 %v1913, 0.0
    %v2088 = vmax.f32 %v1915, 0.0
    %v2089 = vmax.f32 %v1990, 0.0
    %v2090 = vmax.f32 %v1992, 0.0
    %v2091 = vmax.f32 %v2067, 0.0
    %v2092 = vmax.f32 %v2069, 0.0
    %v2093 = vmax.f32 %v1534, 0.0
    %v2094 = vmax.f32 %v1536, 0.0
    %v2095 = vmax.f32 %v1611, 0.0
    %v2096 = vmax.f32 %v1613, 0.0
    %v2097 = vmax.f32 %v1688, 0.0
    %v2098 = vmax.f32 %v1690, 0.0
    %v2099 = vmax.f32 %v1765, 0.0
    %v2100 = vmax.f32 %v1767, 0.0
    %v2101 = vmax.f32 %v1842, 0.0
    %v2102 = vmax.f32 %v1844, 0.0
    %v2103 = vmax.f32 %v1919, 0.0
    %v2104 = vmax.f32 %v1921, 0.0
    %v2105 = vmax.f32 %v1996, 0.0
    %v2106 = vmax.f32 %v1998, 0.0
    %v2107 = vmax.f32 %v2073, 0.0
    %v2108 = vmax.f32 %v2075, 0.0
    %v2109 = vld [vmem:[%s8 + $0x5] sm:$0x1]
    %v2110 = vlaneseq
    %v2111 = vshrl.u32 %v2110, 7
    %v2112 = vsub.s32 0, %v2111
    %v2113 = vrot.slane %v2109, %v2112
    %2114 = vmatprep.subr.mxu0 0.0
    %2115 = vmatpush1.msra.mxu0 %v492
    %2116 = vmatprep.subr.mxu0 0.0
    %2117 = vmatpush1.msra.mxu0 %v491
    %2118 = vmatprep.subr.mxu0 0.0
    %2119 = vmatpush1.msra.mxu0 %v490
    %2120 = vmatprep.subr.mxu0 0.0
    %2121 = vmatpush1.msra.mxu0 %v489
    %2122 = vmatprep.subr.mxu0 0.0
    %2123 = vmatpush1.msra.mxu0 %v488
    %2124 = vmatprep.subr.mxu0 0.0
    %2125 = vmatpush1.msra.mxu0 %v487
    %2126 = vmatprep.subr.mxu0 0.0
    %2127 = vmatpush1.msra.mxu0 %v486
    %2128 = vmatprep.subr.mxu0 0.0
    %2129 = vmatpush1.msra.mxu0 %v485
    %2130 = vmatprep.subr.mxu0 0.0
    %2131 = vmatpush1.msra.mxu0 %v484
    %2132 = vmatprep.subr.mxu0 0.0
    %2133 = vmatpush1.msra.mxu0 %v483
    %2134 = vmatprep.subr.mxu0 0.0
    %2135 = vmatpush1.msra.mxu0 %v482
    %2136 = vmatprep.subr.mxu0 0.0
    %2137 = vmatpush1.msra.mxu0 %v481
    %2138 = vmatprep.subr.mxu0 0.0
    %2139 = vmatpush1.msra.mxu0 %v480
    %2140 = vmatprep.subr.mxu0 0.0
    %2141 = vmatpush1.msra.mxu0 %v479
    %2142 = vmatprep.subr.mxu0 0.0
    %2143 = vmatpush1.msra.mxu0 %v478
    %2144 = vmatprep.subr.mxu0 0.0
    %2145 = vmatpush1.msra.mxu0 %v477
    %2146 = vmatprep.subr.mxu0 0.0
    %2147 = vmatpush2.msra.mxu0 %v508
    %2148 = vmatprep.subr.mxu0 0.0
    %2149 = vmatpush2.msra.mxu0 %v507
    %2150 = vmatprep.subr.mxu0 0.0
    %2151 = vmatpush2.msra.mxu0 %v506
    %2152 = vmatprep.subr.mxu0 0.0
    %2153 = vmatpush2.msra.mxu0 %v505
    %2154 = vmatprep.subr.mxu0 0.0
    %2155 = vmatpush2.msra.mxu0 %v504
    %2156 = vmatprep.subr.mxu0 0.0
    %2157 = vmatpush2.msra.mxu0 %v503
    %2158 = vmatprep.subr.mxu0 0.0
    %2159 = vmatpush2.msra.mxu0 %v502
    %2160 = vmatprep.subr.mxu0 0.0
    %2161 = vmatpush2.msra.mxu0 %v501
    %2162 = vmatprep.subr.mxu0 0.0
    %2163 = vmatpush2.msra.mxu0 %v500
    %2164 = vmatprep.subr.mxu0 0.0
    %2165 = vmatpush2.msra.mxu0 %v499
    %2166 = vmatprep.subr.mxu0 0.0
    %2167 = vmatpush2.msra.mxu0 %v498
    %2168 = vmatprep.subr.mxu0 0.0
    %2169 = vmatpush2.msra.mxu0 %v497
    %2170 = vmatprep.subr.mxu0 0.0
    %2171 = vmatpush2.msra.mxu0 %v496
    %2172 = vmatprep.subr.mxu0 0.0
    %2173 = vmatpush2.msra.mxu0 %v495
    %2174 = vmatprep.subr.mxu0 0.0
    %2175 = vmatpush2.msra.mxu0 %v494
    %2176 = vmatprep.subr.mxu0 0.0
    %2177 = vmatpush2.msra.mxu0 %v493
    %2178 = vmatprep.mubr.f32.mxu0 %v2078
    %2179 = vmatmul.mubr.f32.gmra.mxu0 %v2077
    %v2180 = vpop.f32.mrf.mxu0
    %v2181 = vadd.f32 %v2113, %v2180
    %v2182 = vpop.f32.mrf.mxu0
    %2183 = vmatprep.mubr.f32.mxu0 %v2094
    %2184 = vmatmul.mubr.f32.gmra.mxu0 %v2093
    %v2185 = vpop.f32.mrf.mxu0
    %v2186 = vadd.f32 %v2113, %v2185
    %v2187 = vpop.f32.mrf.mxu0
    %2188 = vdwg.mxu0
    %2189 = vmatprep.subr.mxu0 0.0
    %2190 = vmatpush1.msra.mxu0 %v524
    %2191 = vmatprep.subr.mxu0 0.0
    %2192 = vmatpush1.msra.mxu0 %v523
    %2193 = vmatprep.subr.mxu0 0.0
    %2194 = vmatpush1.msra.mxu0 %v522
    %2195 = vmatprep.subr.mxu0 0.0
    %2196 = vmatpush1.msra.mxu0 %v521
    %2197 = vmatprep.subr.mxu0 0.0
    %2198 = vmatpush1.msra.mxu0 %v520
    %2199 = vmatprep.subr.mxu0 0.0
    %2200 = vmatpush1.msra.mxu0 %v519
    %2201 = vmatprep.subr.mxu0 0.0
    %2202 = vmatpush1.msra.mxu0 %v518
    %2203 = vmatprep.subr.mxu0 0.0
    %2204 = vmatpush1.msra.mxu0 %v517
    %2205 = vmatprep.subr.mxu0 0.0
    %2206 = vmatpush1.msra.mxu0 %v516
    %2207 = vmatprep.subr.mxu0 0.0
    %2208 = vmatpush1.msra.mxu0 %v515
    %2209 = vmatprep.subr.mxu0 0.0
    %2210 = vmatpush1.msra.mxu0 %v514
    %2211 = vmatprep.subr.mxu0 0.0
    %2212 = vmatpush1.msra.mxu0 %v513
    %2213 = vmatprep.subr.mxu0 0.0
    %2214 = vmatpush1.msra.mxu0 %v512
    %2215 = vmatprep.subr.mxu0 0.0
    %2216 = vmatpush1.msra.mxu0 %v511
    %2217 = vmatprep.subr.mxu0 0.0
    %2218 = vmatpush1.msra.mxu0 %v510
    %2219 = vmatprep.subr.mxu0 0.0
    %2220 = vmatpush1.msra.mxu0 %v509
    %2221 = vmatprep.subr.mxu0 0.0
    %2222 = vmatpush2.msra.mxu0 %v540
    %2223 = vmatprep.subr.mxu0 0.0
    %2224 = vmatpush2.msra.mxu0 %v539
    %2225 = vmatprep.subr.mxu0 0.0
    %2226 = vmatpush2.msra.mxu0 %v538
    %2227 = vmatprep.subr.mxu0 0.0
    %2228 = vmatpush2.msra.mxu0 %v537
    %2229 = vmatprep.subr.mxu0 0.0
    %2230 = vmatpush2.msra.mxu0 %v536
    %2231 = vmatprep.subr.mxu0 0.0
    %2232 = vmatpush2.msra.mxu0 %v535
    %2233 = vmatprep.subr.mxu0 0.0
    %2234 = vmatpush2.msra.mxu0 %v534
    %2235 = vmatprep.subr.mxu0 0.0
    %2236 = vmatpush2.msra.mxu0 %v533
    %2237 = vmatprep.subr.mxu0 0.0
    %2238 = vmatpush2.msra.mxu0 %v532
    %2239 = vmatprep.subr.mxu0 0.0
    %2240 = vmatpush2.msra.mxu0 %v531
    %2241 = vmatprep.subr.mxu0 0.0
    %2242 = vmatpush2.msra.mxu0 %v530
    %2243 = vmatprep.subr.mxu0 0.0
    %2244 = vmatpush2.msra.mxu0 %v529
    %2245 = vmatprep.subr.mxu0 0.0
    %2246 = vmatpush2.msra.mxu0 %v528
    %2247 = vmatprep.subr.mxu0 0.0
    %2248 = vmatpush2.msra.mxu0 %v527
    %2249 = vmatprep.subr.mxu0 0.0
    %2250 = vmatpush2.msra.mxu0 %v526
    %2251 = vmatprep.subr.mxu0 0.0
    %2252 = vmatpush2.msra.mxu0 %v525
    %2253 = vmatprep.mubr.f32.mxu0 %v2080
    %2254 = vmatmul.mubr.f32.gmra.mxu0 %v2079
    %v2255 = vpop.f32.mrf.mxu0
    %v2256 = vadd.f32 %v2181, %v2255
    %v2257 = vpop.f32.mrf.mxu0
    %2258 = vmatprep.mubr.f32.mxu0 %v2096
    %2259 = vmatmul.mubr.f32.gmra.mxu0 %v2095
    %v2260 = vpop.f32.mrf.mxu0
    %v2261 = vadd.f32 %v2186, %v2260
    %v2262 = vpop.f32.mrf.mxu0
    %2263 = vdwg.mxu0
    %2264 = vmatprep.subr.mxu0 0.0
    %2265 = vmatpush1.msra.mxu0 %v556
    %2266 = vmatprep.subr.mxu0 0.0
    %2267 = vmatpush1.msra.mxu0 %v555
    %2268 = vmatprep.subr.mxu0 0.0
    %2269 = vmatpush1.msra.mxu0 %v554
    %2270 = vmatprep.subr.mxu0 0.0
    %2271 = vmatpush1.msra.mxu0 %v553
    %2272 = vmatprep.subr.mxu0 0.0
    %2273 = vmatpush1.msra.mxu0 %v552
    %2274 = vmatprep.subr.mxu0 0.0
    %2275 = vmatpush1.msra.mxu0 %v551
    %2276 = vmatprep.subr.mxu0 0.0
    %2277 = vmatpush1.msra.mxu0 %v550
    %2278 = vmatprep.subr.mxu0 0.0
    %2279 = vmatpush1.msra.mxu0 %v549
    %2280 = vmatprep.subr.mxu0 0.0
    %2281 = vmatpush1.msra.mxu0 %v548
    %2282 = vmatprep.subr.mxu0 0.0
    %2283 = vmatpush1.msra.mxu0 %v547
    %2284 = vmatprep.subr.mxu0 0.0
    %2285 = vmatpush1.msra.mxu0 %v546
    %2286 = vmatprep.subr.mxu0 0.0
    %2287 = vmatpush1.msra.mxu0 %v545
    %2288 = vmatprep.subr.mxu0 0.0
    %2289 = vmatpush1.msra.mxu0 %v544
    %2290 = vmatprep.subr.mxu0 0.0
    %2291 = vmatpush1.msra.mxu0 %v543
    %2292 = vmatprep.subr.mxu0 0.0
    %2293 = vmatpush1.msra.mxu0 %v542
    %2294 = vmatprep.subr.mxu0 0.0
    %2295 = vmatpush1.msra.mxu0 %v541
    %2296 = vmatprep.subr.mxu0 0.0
    %2297 = vmatpush2.msra.mxu0 %v572
    %2298 = vmatprep.subr.mxu0 0.0
    %2299 = vmatpush2.msra.mxu0 %v571
    %2300 = vmatprep.subr.mxu0 0.0
    %2301 = vmatpush2.msra.mxu0 %v570
    %2302 = vmatprep.subr.mxu0 0.0
    %2303 = vmatpush2.msra.mxu0 %v569
    %2304 = vmatprep.subr.mxu0 0.0
    %2305 = vmatpush2.msra.mxu0 %v568
    %2306 = vmatprep.subr.mxu0 0.0
    %2307 = vmatpush2.msra.mxu0 %v567
    %2308 = vmatprep.subr.mxu0 0.0
    %2309 = vmatpush2.msra.mxu0 %v566
    %2310 = vmatprep.subr.mxu0 0.0
    %2311 = vmatpush2.msra.mxu0 %v565
    %2312 = vmatprep.subr.mxu0 0.0
    %2313 = vmatpush2.msra.mxu0 %v564
    %2314 = vmatprep.subr.mxu0 0.0
    %2315 = vmatpush2.msra.mxu0 %v563
    %2316 = vmatprep.subr.mxu0 0.0
    %2317 = vmatpush2.msra.mxu0 %v562
    %2318 = vmatprep.subr.mxu0 0.0
    %2319 = vmatpush2.msra.mxu0 %v561
    %2320 = vmatprep.subr.mxu0 0.0
    %2321 = vmatpush2.msra.mxu0 %v560
    %2322 = vmatprep.subr.mxu0 0.0
    %2323 = vmatpush2.msra.mxu0 %v559
    %2324 = vmatprep.subr.mxu0 0.0
    %2325 = vmatpush2.msra.mxu0 %v558
    %2326 = vmatprep.subr.mxu0 0.0
    %2327 = vmatpush2.msra.mxu0 %v557
    %2328 = vmatprep.mubr.f32.mxu0 %v2082
    %2329 = vmatmul.mubr.f32.gmra.mxu0 %v2081
    %v2330 = vpop.f32.mrf.mxu0
    %v2331 = vadd.f32 %v2256, %v2330
    %v2332 = vpop.f32.mrf.mxu0
    %2333 = vmatprep.mubr.f32.mxu0 %v2098
    %2334 = vmatmul.mubr.f32.gmra.mxu0 %v2097
    %v2335 = vpop.f32.mrf.mxu0
    %v2336 = vadd.f32 %v2261, %v2335
    %v2337 = vpop.f32.mrf.mxu0
    %2338 = vdwg.mxu0
    %2339 = vmatprep.subr.mxu0 0.0
    %2340 = vmatpush1.msra.mxu0 %v588
    %2341 = vmatprep.subr.mxu0 0.0
    %2342 = vmatpush1.msra.mxu0 %v587
    %2343 = vmatprep.subr.mxu0 0.0
    %2344 = vmatpush1.msra.mxu0 %v586
    %2345 = vmatprep.subr.mxu0 0.0
    %2346 = vmatpush1.msra.mxu0 %v585
    %2347 = vmatprep.subr.mxu0 0.0
    %2348 = vmatpush1.msra.mxu0 %v584
    %2349 = vmatprep.subr.mxu0 0.0
    %2350 = vmatpush1.msra.mxu0 %v583
    %2351 = vmatprep.subr.mxu0 0.0
    %2352 = vmatpush1.msra.mxu0 %v582
    %2353 = vmatprep.subr.mxu0 0.0
    %2354 = vmatpush1.msra.mxu0 %v581
    %2355 = vmatprep.subr.mxu0 0.0
    %2356 = vmatpush1.msra.mxu0 %v580
    %2357 = vmatprep.subr.mxu0 0.0
    %2358 = vmatpush1.msra.mxu0 %v579
    %2359 = vmatprep.subr.mxu0 0.0
    %2360 = vmatpush1.msra.mxu0 %v578
    %2361 = vmatprep.subr.mxu0 0.0
    %2362 = vmatpush1.msra.mxu0 %v577
    %2363 = vmatprep.subr.mxu0 0.0
    %2364 = vmatpush1.msra.mxu0 %v576
    %2365 = vmatprep.subr.mxu0 0.0
    %2366 = vmatpush1.msra.mxu0 %v575
    %2367 = vmatprep.subr.mxu0 0.0
    %2368 = vmatpush1.msra.mxu0 %v574
    %2369 = vmatprep.subr.mxu0 0.0
    %2370 = vmatpush1.msra.mxu0 %v573
    %2371 = vmatprep.subr.mxu0 0.0
    %2372 = vmatpush2.msra.mxu0 %v604
    %2373 = vmatprep.subr.mxu0 0.0
    %2374 = vmatpush2.msra.mxu0 %v603
    %2375 = vmatprep.subr.mxu0 0.0
    %2376 = vmatpush2.msra.mxu0 %v602
    %2377 = vmatprep.subr.mxu0 0.0
    %2378 = vmatpush2.msra.mxu0 %v601
    %2379 = vmatprep.subr.mxu0 0.0
    %2380 = vmatpush2.msra.mxu0 %v600
    %2381 = vmatprep.subr.mxu0 0.0
    %2382 = vmatpush2.msra.mxu0 %v599
    %2383 = vmatprep.subr.mxu0 0.0
    %2384 = vmatpush2.msra.mxu0 %v598
    %2385 = vmatprep.subr.mxu0 0.0
    %2386 = vmatpush2.msra.mxu0 %v597
    %2387 = vmatprep.subr.mxu0 0.0
    %2388 = vmatpush2.msra.mxu0 %v596
    %2389 = vmatprep.subr.mxu0 0.0
    %2390 = vmatpush2.msra.mxu0 %v595
    %2391 = vmatprep.subr.mxu0 0.0
    %2392 = vmatpush2.msra.mxu0 %v594
    %2393 = vmatprep.subr.mxu0 0.0
    %2394 = vmatpush2.msra.mxu0 %v593
    %2395 = vmatprep.subr.mxu0 0.0
    %2396 = vmatpush2.msra.mxu0 %v592
    %2397 = vmatprep.subr.mxu0 0.0
    %2398 = vmatpush2.msra.mxu0 %v591
    %2399 = vmatprep.subr.mxu0 0.0
    %2400 = vmatpush2.msra.mxu0 %v590
    %2401 = vmatprep.subr.mxu0 0.0
    %2402 = vmatpush2.msra.mxu0 %v589
    %2403 = vmatprep.mubr.f32.mxu0 %v2084
    %2404 = vmatmul.mubr.f32.gmra.mxu0 %v2083
    %v2405 = vpop.f32.mrf.mxu0
    %v2406 = vadd.f32 %v2331, %v2405
    %v2407 = vpop.f32.mrf.mxu0
    %2408 = vmatprep.mubr.f32.mxu0 %v2100
    %2409 = vmatmul.mubr.f32.gmra.mxu0 %v2099
    %v2410 = vpop.f32.mrf.mxu0
    %v2411 = vadd.f32 %v2336, %v2410
    %v2412 = vpop.f32.mrf.mxu0
    %2413 = vdwg.mxu0
    %2414 = vmatprep.subr.mxu0 0.0
    %2415 = vmatpush1.msra.mxu0 %v620
    %2416 = vmatprep.subr.mxu0 0.0
    %2417 = vmatpush1.msra.mxu0 %v619
    %2418 = vmatprep.subr.mxu0 0.0
    %2419 = vmatpush1.msra.mxu0 %v618
    %2420 = vmatprep.subr.mxu0 0.0
    %2421 = vmatpush1.msra.mxu0 %v617
    %2422 = vmatprep.subr.mxu0 0.0
    %2423 = vmatpush1.msra.mxu0 %v616
    %2424 = vmatprep.subr.mxu0 0.0
    %2425 = vmatpush1.msra.mxu0 %v615
    %2426 = vmatprep.subr.mxu0 0.0
    %2427 = vmatpush1.msra.mxu0 %v614
    %2428 = vmatprep.subr.mxu0 0.0
    %2429 = vmatpush1.msra.mxu0 %v613
    %2430 = vmatprep.subr.mxu0 0.0
    %2431 = vmatpush1.msra.mxu0 %v612
    %2432 = vmatprep.subr.mxu0 0.0
    %2433 = vmatpush1.msra.mxu0 %v611
    %2434 = vmatprep.subr.mxu0 0.0
    %2435 = vmatpush1.msra.mxu0 %v610
    %2436 = vmatprep.subr.mxu0 0.0
    %2437 = vmatpush1.msra.mxu0 %v609
    %2438 = vmatprep.subr.mxu0 0.0
    %2439 = vmatpush1.msra.mxu0 %v608
    %2440 = vmatprep.subr.mxu0 0.0
    %2441 = vmatpush1.msra.mxu0 %v607
    %2442 = vmatprep.subr.mxu0 0.0
    %2443 = vmatpush1.msra.mxu0 %v606
    %2444 = vmatprep.subr.mxu0 0.0
    %2445 = vmatpush1.msra.mxu0 %v605
    %2446 = vmatprep.subr.mxu0 0.0
    %2447 = vmatpush2.msra.mxu0 %v636
    %2448 = vmatprep.subr.mxu0 0.0
    %2449 = vmatpush2.msra.mxu0 %v635
    %2450 = vmatprep.subr.mxu0 0.0
    %2451 = vmatpush2.msra.mxu0 %v634
    %2452 = vmatprep.subr.mxu0 0.0
    %2453 = vmatpush2.msra.mxu0 %v633
    %2454 = vmatprep.subr.mxu0 0.0
    %2455 = vmatpush2.msra.mxu0 %v632
    %2456 = vmatprep.subr.mxu0 0.0
    %2457 = vmatpush2.msra.mxu0 %v631
    %2458 = vmatprep.subr.mxu0 0.0
    %2459 = vmatpush2.msra.mxu0 %v630
    %2460 = vmatprep.subr.mxu0 0.0
    %2461 = vmatpush2.msra.mxu0 %v629
    %2462 = vmatprep.subr.mxu0 0.0
    %2463 = vmatpush2.msra.mxu0 %v628
    %2464 = vmatprep.subr.mxu0 0.0
    %2465 = vmatpush2.msra.mxu0 %v627
    %2466 = vmatprep.subr.mxu0 0.0
    %2467 = vmatpush2.msra.mxu0 %v626
    %2468 = vmatprep.subr.mxu0 0.0
    %2469 = vmatpush2.msra.mxu0 %v625
    %2470 = vmatprep.subr.mxu0 0.0
    %2471 = vmatpush2.msra.mxu0 %v624
    %2472 = vmatprep.subr.mxu0 0.0
    %2473 = vmatpush2.msra.mxu0 %v623
    %2474 = vmatprep.subr.mxu0 0.0
    %2475 = vmatpush2.msra.mxu0 %v622
    %2476 = vmatprep.subr.mxu0 0.0
    %2477 = vmatpush2.msra.mxu0 %v621
    %2478 = vmatprep.mubr.f32.mxu0 %v2086
    %2479 = vmatmul.mubr.f32.gmra.mxu0 %v2085
    %v2480 = vpop.f32.mrf.mxu0
    %v2481 = vadd.f32 %v2406, %v2480
    %v2482 = vpop.f32.mrf.mxu0
    %2483 = vmatprep.mubr.f32.mxu0 %v2102
    %2484 = vmatmul.mubr.f32.gmra.mxu0 %v2101
    %v2485 = vpop.f32.mrf.mxu0
    %v2486 = vadd.f32 %v2411, %v2485
    %v2487 = vpop.f32.mrf.mxu0
    %2488 = vdwg.mxu0
    %2489 = vmatprep.subr.mxu0 0.0
    %2490 = vmatpush1.msra.mxu0 %v652
    %2491 = vmatprep.subr.mxu0 0.0
    %2492 = vmatpush1.msra.mxu0 %v651
    %2493 = vmatprep.subr.mxu0 0.0
    %2494 = vmatpush1.msra.mxu0 %v650
    %2495 = vmatprep.subr.mxu0 0.0
    %2496 = vmatpush1.msra.mxu0 %v649
    %2497 = vmatprep.subr.mxu0 0.0
    %2498 = vmatpush1.msra.mxu0 %v648
    %2499 = vmatprep.subr.mxu0 0.0
    %2500 = vmatpush1.msra.mxu0 %v647
    %2501 = vmatprep.subr.mxu0 0.0
    %2502 = vmatpush1.msra.mxu0 %v646
    %2503 = vmatprep.subr.mxu0 0.0
    %2504 = vmatpush1.msra.mxu0 %v645
    %2505 = vmatprep.subr.mxu0 0.0
    %2506 = vmatpush1.msra.mxu0 %v644
    %2507 = vmatprep.subr.mxu0 0.0
    %2508 = vmatpush1.msra.mxu0 %v643
    %2509 = vmatprep.subr.mxu0 0.0
    %2510 = vmatpush1.msra.mxu0 %v642
    %2511 = vmatprep.subr.mxu0 0.0
    %2512 = vmatpush1.msra.mxu0 %v641
    %2513 = vmatprep.subr.mxu0 0.0
    %2514 = vmatpush1.msra.mxu0 %v640
    %2515 = vmatprep.subr.mxu0 0.0
    %2516 = vmatpush1.msra.mxu0 %v639
    %2517 = vmatprep.subr.mxu0 0.0
    %2518 = vmatpush1.msra.mxu0 %v638
    %2519 = vmatprep.subr.mxu0 0.0
    %2520 = vmatpush1.msra.mxu0 %v637
    %2521 = vmatprep.subr.mxu0 0.0
    %2522 = vmatpush2.msra.mxu0 %v668
    %2523 = vmatprep.subr.mxu0 0.0
    %2524 = vmatpush2.msra.mxu0 %v667
    %2525 = vmatprep.subr.mxu0 0.0
    %2526 = vmatpush2.msra.mxu0 %v666
    %2527 = vmatprep.subr.mxu0 0.0
    %2528 = vmatpush2.msra.mxu0 %v665
    %2529 = vmatprep.subr.mxu0 0.0
    %2530 = vmatpush2.msra.mxu0 %v664
    %2531 = vmatprep.subr.mxu0 0.0
    %2532 = vmatpush2.msra.mxu0 %v663
    %2533 = vmatprep.subr.mxu0 0.0
    %2534 = vmatpush2.msra.mxu0 %v662
    %2535 = vmatprep.subr.mxu0 0.0
    %2536 = vmatpush2.msra.mxu0 %v661
    %2537 = vmatprep.subr.mxu0 0.0
    %2538 = vmatpush2.msra.mxu0 %v660
    %2539 = vmatprep.subr.mxu0 0.0
    %2540 = vmatpush2.msra.mxu0 %v659
    %2541 = vmatprep.subr.mxu0 0.0
    %2542 = vmatpush2.msra.mxu0 %v658
    %2543 = vmatprep.subr.mxu0 0.0
    %2544 = vmatpush2.msra.mxu0 %v657
    %2545 = vmatprep.subr.mxu0 0.0
    %2546 = vmatpush2.msra.mxu0 %v656
    %2547 = vmatprep.subr.mxu0 0.0
    %2548 = vmatpush2.msra.mxu0 %v655
    %2549 = vmatprep.subr.mxu0 0.0
    %2550 = vmatpush2.msra.mxu0 %v654
    %2551 = vmatprep.subr.mxu0 0.0
    %2552 = vmatpush2.msra.mxu0 %v653
    %2553 = vmatprep.mubr.f32.mxu0 %v2088
    %2554 = vmatmul.mubr.f32.gmra.mxu0 %v2087
    %v2555 = vpop.f32.mrf.mxu0
    %v2556 = vadd.f32 %v2481, %v2555
    %v2557 = vpop.f32.mrf.mxu0
    %2558 = vmatprep.mubr.f32.mxu0 %v2104
    %2559 = vmatmul.mubr.f32.gmra.mxu0 %v2103
    %v2560 = vpop.f32.mrf.mxu0
    %v2561 = vadd.f32 %v2486, %v2560
    %v2562 = vpop.f32.mrf.mxu0
    %2563 = vdwg.mxu0
    %2564 = vmatprep.subr.mxu0 0.0
    %2565 = vmatpush1.msra.mxu0 %v684
    %2566 = vmatprep.subr.mxu0 0.0
    %2567 = vmatpush1.msra.mxu0 %v683
    %2568 = vmatprep.subr.mxu0 0.0
    %2569 = vmatpush1.msra.mxu0 %v682
    %2570 = vmatprep.subr.mxu0 0.0
    %2571 = vmatpush1.msra.mxu0 %v681
    %2572 = vmatprep.subr.mxu0 0.0
    %2573 = vmatpush1.msra.mxu0 %v680
    %2574 = vmatprep.subr.mxu0 0.0
    %2575 = vmatpush1.msra.mxu0 %v679
    %2576 = vmatprep.subr.mxu0 0.0
    %2577 = vmatpush1.msra.mxu0 %v678
    %2578 = vmatprep.subr.mxu0 0.0
    %2579 = vmatpush1.msra.mxu0 %v677
    %2580 = vmatprep.subr.mxu0 0.0
    %2581 = vmatpush1.msra.mxu0 %v676
    %2582 = vmatprep.subr.mxu0 0.0
    %2583 = vmatpush1.msra.mxu0 %v675
    %2584 = vmatprep.subr.mxu0 0.0
    %2585 = vmatpush1.msra.mxu0 %v674
    %2586 = vmatprep.subr.mxu0 0.0
    %2587 = vmatpush1.msra.mxu0 %v673
    %2588 = vmatprep.subr.mxu0 0.0
    %2589 = vmatpush1.msra.mxu0 %v672
    %2590 = vmatprep.subr.mxu0 0.0
    %2591 = vmatpush1.msra.mxu0 %v671
    %2592 = vmatprep.subr.mxu0 0.0
    %2593 = vmatpush1.msra.mxu0 %v670
    %2594 = vmatprep.subr.mxu0 0.0
    %2595 = vmatpush1.msra.mxu0 %v669
    %2596 = vmatprep.subr.mxu0 0.0
    %2597 = vmatpush2.msra.mxu0 %v700
    %2598 = vmatprep.subr.mxu0 0.0
    %2599 = vmatpush2.msra.mxu0 %v699
    %2600 = vmatprep.subr.mxu0 0.0
    %2601 = vmatpush2.msra.mxu0 %v698
    %2602 = vmatprep.subr.mxu0 0.0
    %2603 = vmatpush2.msra.mxu0 %v697
    %2604 = vmatprep.subr.mxu0 0.0
    %2605 = vmatpush2.msra.mxu0 %v696
    %2606 = vmatprep.subr.mxu0 0.0
    %2607 = vmatpush2.msra.mxu0 %v695
    %2608 = vmatprep.subr.mxu0 0.0
    %2609 = vmatpush2.msra.mxu0 %v694
    %2610 = vmatprep.subr.mxu0 0.0
    %2611 = vmatpush2.msra.mxu0 %v693
    %2612 = vmatprep.subr.mxu0 0.0
    %2613 = vmatpush2.msra.mxu0 %v692
    %2614 = vmatprep.subr.mxu0 0.0
    %2615 = vmatpush2.msra.mxu0 %v691
    %2616 = vmatprep.subr.mxu0 0.0
    %2617 = vmatpush2.msra.mxu0 %v690
    %2618 = vmatprep.subr.mxu0 0.0
    %2619 = vmatpush2.msra.mxu0 %v689
    %2620 = vmatprep.subr.mxu0 0.0
    %2621 = vmatpush2.msra.mxu0 %v688
    %2622 = vmatprep.subr.mxu0 0.0
    %2623 = vmatpush2.msra.mxu0 %v687
    %2624 = vmatprep.subr.mxu0 0.0
    %2625 = vmatpush2.msra.mxu0 %v686
    %2626 = vmatprep.subr.mxu0 0.0
    %2627 = vmatpush2.msra.mxu0 %v685
    %2628 = vmatprep.mubr.f32.mxu0 %v2090
    %2629 = vmatmul.mubr.f32.gmra.mxu0 %v2089
    %v2630 = vpop.f32.mrf.mxu0
    %v2631 = vadd.f32 %v2556, %v2630
    %v2632 = vpop.f32.mrf.mxu0
    %2633 = vmatprep.mubr.f32.mxu0 %v2106
    %2634 = vmatmul.mubr.f32.gmra.mxu0 %v2105
    %v2635 = vpop.f32.mrf.mxu0
    %v2636 = vadd.f32 %v2561, %v2635
    %v2637 = vpop.f32.mrf.mxu0
    %2638 = vdwg.mxu0
    %2639 = vmatprep.subr.mxu0 0.0
    %2640 = vmatpush1.msra.mxu0 %v716
    %2641 = vmatprep.subr.mxu0 0.0
    %2642 = vmatpush1.msra.mxu0 %v715
    %2643 = vmatprep.subr.mxu0 0.0
    %2644 = vmatpush1.msra.mxu0 %v714
    %2645 = vmatprep.subr.mxu0 0.0
    %2646 = vmatpush1.msra.mxu0 %v713
    %2647 = vmatprep.subr.mxu0 0.0
    %2648 = vmatpush1.msra.mxu0 %v712
    %2649 = vmatprep.subr.mxu0 0.0
    %2650 = vmatpush1.msra.mxu0 %v711
    %2651 = vmatprep.subr.mxu0 0.0
    %2652 = vmatpush1.msra.mxu0 %v710
    %2653 = vmatprep.subr.mxu0 0.0
    %2654 = vmatpush1.msra.mxu0 %v709
    %2655 = vmatprep.subr.mxu0 0.0
    %2656 = vmatpush1.msra.mxu0 %v708
    %2657 = vmatprep.subr.mxu0 0.0
    %2658 = vmatpush1.msra.mxu0 %v707
    %2659 = vmatprep.subr.mxu0 0.0
    %2660 = vmatpush1.msra.mxu0 %v706
    %2661 = vmatprep.subr.mxu0 0.0
    %2662 = vmatpush1.msra.mxu0 %v705
    %2663 = vmatprep.subr.mxu0 0.0
    %2664 = vmatpush1.msra.mxu0 %v704
    %2665 = vmatprep.subr.mxu0 0.0
    %2666 = vmatpush1.msra.mxu0 %v703
    %2667 = vmatprep.subr.mxu0 0.0
    %2668 = vmatpush1.msra.mxu0 %v702
    %2669 = vmatprep.subr.mxu0 0.0
    %2670 = vmatpush1.msra.mxu0 %v701
    %2671 = vmatprep.subr.mxu0 0.0
    %2672 = vmatpush2.msra.mxu0 %v732
    %2673 = vmatprep.subr.mxu0 0.0
    %2674 = vmatpush2.msra.mxu0 %v731
    %2675 = vmatprep.subr.mxu0 0.0
    %2676 = vmatpush2.msra.mxu0 %v730
    %2677 = vmatprep.subr.mxu0 0.0
    %2678 = vmatpush2.msra.mxu0 %v729
    %2679 = vmatprep.subr.mxu0 0.0
    %2680 = vmatpush2.msra.mxu0 %v728
    %2681 = vmatprep.subr.mxu0 0.0
    %2682 = vmatpush2.msra.mxu0 %v727
    %2683 = vmatprep.subr.mxu0 0.0
    %2684 = vmatpush2.msra.mxu0 %v726
    %2685 = vmatprep.subr.mxu0 0.0
    %2686 = vmatpush2.msra.mxu0 %v725
    %2687 = vmatprep.subr.mxu0 0.0
    %2688 = vmatpush2.msra.mxu0 %v724
    %2689 = vmatprep.subr.mxu0 0.0
    %2690 = vmatpush2.msra.mxu0 %v723
    %2691 = vmatprep.subr.mxu0 0.0
    %2692 = vmatpush2.msra.mxu0 %v722
    %2693 = vmatprep.subr.mxu0 0.0
    %2694 = vmatpush2.msra.mxu0 %v721
    %2695 = vmatprep.subr.mxu0 0.0
    %2696 = vmatpush2.msra.mxu0 %v720
    %2697 = vmatprep.subr.mxu0 0.0
    %2698 = vmatpush2.msra.mxu0 %v719
    %2699 = vmatprep.subr.mxu0 0.0
    %2700 = vmatpush2.msra.mxu0 %v718
    %2701 = vmatprep.subr.mxu0 0.0
    %2702 = vmatpush2.msra.mxu0 %v717
    %2703 = vmatprep.mubr.f32.mxu0 %v2092
    %2704 = vmatmul.mubr.f32.gmra.mxu0 %v2091
    %v2705 = vpop.f32.mrf.mxu0
    %v2706 = vadd.f32 %v2631, %v2705
    %v2707 = vpop.f32.mrf.mxu0
    %2708 = vmatprep.mubr.f32.mxu0 %v2108
    %2709 = vmatmul.mubr.f32.gmra.mxu0 %v2107
    %v2710 = vpop.f32.mrf.mxu0
    %v2711 = vadd.f32 %v2636, %v2710
    %v2712 = vpop.f32.mrf.mxu0
    %2713 = vdwg.mxu0
    %v2714 = vmul.f32 %v1318, %v2706
    %v2715 = vmul.f32 %v1318, %v2711
    %v2716 = vadd.f32 %v1321, %v2714
    %v2717 = vadd.f32 %v1322, %v2715
    %v2718 = vld [vmem:[%s8 + $0x6] sm:$0x1]
    %v2719 = vlaneseq
    %v2720 = vshrl.u32 %v2719, 7
    %v2721 = vsub.s32 0, %v2720
    %v2722 = vrot.slane %v2718, %v2721
    %v2724 = vsel %vm836, %v2716, 0
    %v2727 = vsel %vm836, %v2717, 0
    %v2730 = vsel %vm843, %v742, 0
    %2732 = vmatprep.subr.mxu0 0.0
    %2733 = vmatpush1.msra.mxu0 0.0
    %2734 = vmatprep.subr.mxu0 0.0
    %2735 = vmatpush1.msra.mxu0 0.0
    %2736 = vmatprep.subr.mxu0 0.0
    %2737 = vmatpush1.msra.mxu0 0.0
    %2738 = vmatprep.subr.mxu0 0.0
    %2739 = vmatpush1.msra.mxu0 0.0
    %2740 = vmatprep.subr.mxu0 0.0
    %2741 = vmatpush1.msra.mxu0 0.0
    %2742 = vmatprep.subr.mxu0 0.0
    %2743 = vmatpush1.msra.mxu0 0.0
    %2744 = vmatprep.subr.mxu0 0.0
    %2745 = vmatpush1.msra.mxu0 0.0
    %2746 = vmatprep.subr.mxu0 0.0
    %2747 = vmatpush1.msra.mxu0 0.0
    %2748 = vmatprep.subr.mxu0 0.0
    %2749 = vmatpush1.msra.mxu0 0.0
    %2750 = vmatprep.subr.mxu0 0.0
    %2751 = vmatpush1.msra.mxu0 0.0
    %2752 = vmatprep.subr.mxu0 0.0
    %2753 = vmatpush1.msra.mxu0 0.0
    %2754 = vmatprep.subr.mxu0 0.0
    %2755 = vmatpush1.msra.mxu0 %v2730
    %2756 = vmatprep.subr.mxu0 0.0
    %2757 = vmatpush1.msra.mxu0 %v741
    %2758 = vmatprep.subr.mxu0 0.0
    %2759 = vmatpush1.msra.mxu0 %v740
    %2760 = vmatprep.subr.mxu0 0.0
    %2761 = vmatpush1.msra.mxu0 %v739
    %2762 = vmatprep.subr.mxu0 0.0
    %2763 = vmatpush1.msra.mxu0 %v738
    %2764 = vmatprep.subr.mxu0 0.0
    %2765 = vmatpush2.msra.mxu0 0.0
    %2766 = vmatprep.subr.mxu0 0.0
    %2767 = vmatpush2.msra.mxu0 0.0
    %2768 = vmatprep.subr.mxu0 0.0
    %2769 = vmatpush2.msra.mxu0 0.0
    %2770 = vmatprep.subr.mxu0 0.0
    %2771 = vmatpush2.msra.mxu0 0.0
    %2772 = vmatprep.subr.mxu0 0.0
    %2773 = vmatpush2.msra.mxu0 0.0
    %2774 = vmatprep.subr.mxu0 0.0
    %2775 = vmatpush2.msra.mxu0 0.0
    %2776 = vmatprep.subr.mxu0 0.0
    %2777 = vmatpush2.msra.mxu0 0.0
    %2778 = vmatprep.subr.mxu0 0.0
    %2779 = vmatpush2.msra.mxu0 0.0
    %2780 = vmatprep.subr.mxu0 0.0
    %2781 = vmatpush2.msra.mxu0 0.0
    %2782 = vmatprep.subr.mxu0 0.0
    %2783 = vmatpush2.msra.mxu0 0.0
    %2784 = vmatprep.subr.mxu0 0.0
    %2785 = vmatpush2.msra.mxu0 0.0
    %2786 = vmatprep.subr.mxu0 0.0
    %2787 = vmatpush2.msra.mxu0 0.0
    %2788 = vmatprep.subr.mxu0 0.0
    %2789 = vmatpush2.msra.mxu0 0.0
    %2790 = vmatprep.subr.mxu0 0.0
    %2791 = vmatpush2.msra.mxu0 0.0
    %2792 = vmatprep.subr.mxu0 0.0
    %2793 = vmatpush2.msra.mxu0 0.0
    %2794 = vmatprep.subr.mxu0 0.0
    %2795 = vmatpush2.msra.mxu0 0.0
    %2796 = vmatprep.mubr.f32.mxu0 0.0
    %2797 = vmatmul.mubr.f32.gmra.mxu0 %v2724
    %v2798 = vpop.f32.mrf.mxu0
    %v2799 = vadd.f32 %v2722, %v2798
    %v2800 = vpop.f32.mrf.mxu0
    %2801 = vmatprep.mubr.f32.mxu0 0.0
    %2802 = vmatmul.mubr.f32.gmra.mxu0 %v2727
    %v2803 = vpop.f32.mrf.mxu0
    %v2804 = vadd.f32 %v2722, %v2803
    %v2805 = vpop.f32.mrf.mxu0
    %2806 = vdwg.mxu0
    %2807 = vst [vmem:[#allocation3] sm:$0xff] %v2799
    %2808 = vst [vmem:[#allocation3 + $0x8] sm:$0xff] %v2804
    // Predicated region
    $region42: #{tpu_custom_call.1} parent=1 // pred_check
      _
    $region43: #{tpu_custom_call.1} parent=1 // pred_check_branch
      %2810 = sbr.rel (0) target = $region45
    $region44: #{tpu_custom_call.1} parent=1 // pred_region
      %s2812 = ssub.s32 256, 256
      %2813 = vsyncadd [#allocation4], %s2812
      %s2814 = sshll.u32 [#allocation3], 4
      %s2815 = int_to_ptr.vmem [resolvable:$true] %s2814
      %2820 = dma.vmem_to_hbm [thread:$0]  %s2815, 256, %s10, [#allocation4], 128, 128, 8
    $region45: #{tpu_custom_call.1} parent=1 // pred_fallthru
      _
    // Predicated region
    $region46: #{tpu_custom_call.1} parent=1 // pred_check
      _
    $region47: #{tpu_custom_call.1} parent=1 // pred_check_branch
      %2822 = sbr.rel (0) target = $region49
    $region48: #{tpu_custom_call.1} parent=1 // pred_region
      %2823 = dma.done [#allocation4], 256
    $region49: #{tpu_custom_call.1} parent=1 // pred_fallthru
      _
    %2824 = vsyncpa [#allocation4], 1

</llo_original>
